<compile_context>
chip_gen: v7x
topology: tpu7x:2x2x1
jax: 0.10.0
libtpu: 0.0.40
codegen_flags: <defaults>
</compile_context>

<pallas_src>
import functools

import jax
import jax.numpy as jnp
from jax.experimental import pallas as pl
from jax.experimental.pallas import tpu as pltpu

BN_EPS = 1e-5
LANE = 128


# --------------------------------------------------------------------------
# Host-side packing helpers (layout plumbing, done ONCE outside the call path).
# --------------------------------------------------------------------------
def _rup(n, m=LANE):
    return -(-n // m) * m


def _pad2(a, rows, cols):
    return jnp.pad(a, ((0, rows - a.shape[0]), (0, cols - a.shape[1])))


def _split_pad_cols(a, chunk, chunk_p):
    """(R, n*chunk) -> (R, n*chunk_p); each column chunk zero-padded on the right."""
    n = a.shape[1] // chunk
    return jnp.concatenate(
        [jnp.pad(a[:, i * chunk:(i + 1) * chunk], ((0, 0), (0, chunk_p - chunk)))
         for i in range(n)], axis=1)


def _split_pad_rows(a, chunk, chunk_p):
    """(n*chunk, C) -> (n*chunk_p, C); each row chunk zero-padded at the bottom."""
    n = a.shape[0] // chunk
    return jnp.concatenate(
        [jnp.pad(a[i * chunk:(i + 1) * chunk], ((0, chunk_p - chunk), (0, 0)))
         for i in range(n)], axis=0)


def _perm_even_odd_rows(w):
    """Reorder out-features (rows of the PyTorch (2H, in) weight) to [even | odd]."""
    return jnp.concatenate([w[0::2], w[1::2]], axis=0)


def _perm_even_odd_vec(v):
    return jnp.concatenate([v[0::2], v[1::2]])


def _pad_vec(v, n):
    return jnp.pad(v, (0, n - v.shape[0]))


def pack_params(params, input_size, hidden_size, output_size):
    """Convert PyTorch-layout parameters into the kernel's padded/packed layout.

    Call this ONCE and reuse the returned dict across forward calls.
    NOTE: Linear biases of BN-followed layers are intentionally dropped -- this
    is only correct because BN runs in training mode (batch-mean subtraction).
    """
    H0, H1, H2 = hidden_size
    Dp, H0p, H1p, H2p = _rup(input_size), _rup(H0), _rup(H1), _rup(H2)
    OutP = _rup(output_size)           # GEMM N-dim for the output layer (lane-dense)
    Out8 = _rup(output_size, 8)        # stored output columns (tiny writeback)
    Fmax = max(H0p, 2 * H1p, 2 * H2p, OutP)
    dims = dict(Dp=Dp, H0p=H0p, H1p=H1p, H2p=H2p, OutP=OutP, Out8=Out8, Fmax=Fmax)

    # Input layer weight: PyTorch (H0, D) -> (Dp, H0p) bf16, so kernel does x @ W.
    w_in = _pad2(params["w_in"].T, Dp, H0p).astype(jnp.bfloat16)

    def pack_mo_w(w, in_chunk, in_chunk_p, hid, hid_p):
        # w: PyTorch (2*hid, in); maxout pairs are interleaved along the out axis.
        wt = _perm_even_odd_rows(w).T               # (in, 2*hid), cols = [even | odd]
        wt = _split_pad_rows(wt, in_chunk, in_chunk_p)
        wt = _split_pad_cols(wt, hid, hid_p)
        return wt.astype(jnp.bfloat16)

    # Maxout block 0: input is the (single-chunk) H0 activation.
    w_mo0 = jnp.stack([pack_mo_w(params[f"w_mo0_{j}"], H0, H0p, H1, H1p)
                       for j in range(3)])
    # Maxout block 1: input is the 3-chunk list of H1-wide sub-outputs.
    w_mo1 = jnp.stack([pack_mo_w(params[f"w_mo1_{j}"], H1, H1p, H2, H2p)
                       for j in range(3)])

    # Output layer weight: (Out, 3*H2) -> (3*H2p, OutP) bf16.
    w_out = _split_pad_rows(params["w_out"].T, H2, H2p)
    w_out = _pad2(w_out, 3 * H2p, OutP).astype(jnp.bfloat16)

    # One packed f32 slab for every small per-feature vector.
    # rows: 0 g_in, 1 be_in, 2..7 (g,be) x 3 for maxout0, 8..13 for maxout1, 14 b_out.
    # Padded lanes get gamma=0 / beta=0, so padded features stay exactly zero.
    rows = [_pad_vec(params["g_in"], Fmax), _pad_vec(params["be_in"], Fmax)]
    for b, (hid, hid_p) in enumerate([(H1, H1p), (H2, H2p)]):
        for j in range(3):
            for name in ("g", "be"):
                v = _perm_even_odd_vec(params[f"{name}_mo{b}_{j}"])
                v = jnp.concatenate([_pad_vec(v[:hid], hid_p), _pad_vec(v[hid:], hid_p)])
                rows.append(_pad_vec(v, Fmax))
    rows.append(_pad_vec(params["b_out"], Fmax))            # row 14
    vecs = jnp.stack(rows)                                   # (15, Fmax) f32
    vecs = jnp.pad(vecs, ((0, 16 - vecs.shape[0]), (0, 0)))  # (16, Fmax)

    return dict(w_in=w_in, w_mo0=w_mo0, w_mo1=w_mo1, w_out=w_out,
                vecs=vecs, dims=dims)


# --------------------------------------------------------------------------
# Kernel: whole forward pass fused, everything VMEM resident.
# --------------------------------------------------------------------------
def _discriminator_kernel(x_ref, w_in_ref, w_mo0_ref, w_mo1_ref, w_out_ref,
                          vec_ref, o_ref, *, H0p, H1p, H2p, OutP, Out8):
    def bn_train(z, grow, width):
        # Train-mode BatchNorm1d.  Two-pass variance (no cancellation), then
        # normalize + affine folded into one FMA:
        #   s = gamma * rsqrt(var + eps),  y = (z - mean) * s + beta.
        # (Linear bias before train-mode BN cancels exactly, so it is omitted.)
        g = vec_ref[grow:grow + 1, 0:width]
        be = vec_ref[grow + 1:grow + 2, 0:width]
        mean = jnp.mean(z, axis=0, keepdims=True)
        d = z - mean
        var = jnp.mean(d * d, axis=0, keepdims=True)
        s = g * jax.lax.rsqrt(var + BN_EPS)
        return d * s + be

    # ---- input layer: Linear -> BN -> ReLU (x arrives bf16 from the host) ----
    h = jnp.dot(x_ref[...], w_in_ref[...],
                preferred_element_type=jnp.float32)                 # (B, H0p) f32
    h = jnp.maximum(bn_train(h, 0, H0p), 0.0)
    chunks = [h.astype(jnp.bfloat16)]                                # 1 chunk of H0p

    # ---- Maxout blocks --------------------------------------------------------
    # Weight columns are pre-permuted so the maxout pair (2k, 2k+1) lands at
    # columns (k, hid_p + k): the pairwise max is an elementwise max of two
    # contiguous, 128-aligned halves.  The block input arrives as a LIST of
    # bf16 chunks; the GEMM is accumulated per chunk (no f32 concat in VMEM).
    def maxout_block(in_chunks, chunk, w_ref, hid_p, base_row):
        outs = []
        for j in range(3):
            z = jnp.dot(in_chunks[0], w_ref[j, 0:chunk, :],
                        preferred_element_type=jnp.float32)          # (B, 2*hid_p)
            for c in range(1, len(in_chunks)):
                z = z + jnp.dot(in_chunks[c],
                                w_ref[j, c * chunk:(c + 1) * chunk, :],
                                preferred_element_type=jnp.float32)
            z = bn_train(z, base_row + 2 * j, 2 * hid_p)
            m = jnp.maximum(z[:, 0:hid_p], z[:, hid_p:2 * hid_p])    # maxout pairs
            outs.append(m.astype(jnp.bfloat16))
        # TODO(synk): nn.Dropout treated as identity (inference); stochastic
        # training dropout would need pltpu.prng_seed / prng_random_bits.
        return outs

    chunks = maxout_block(chunks, H0p, w_mo0_ref, H1p, 2)    # 3 chunks of H1p
    chunks = maxout_block(chunks, H1p, w_mo1_ref, H2p, 8)    # 3 chunks of H2p

    # ---- output layer: Linear -> Sigmoid (accumulated over the 3 K-chunks) ----
    z = jnp.dot(chunks[0], w_out_ref[0:H2p, :], preferred_element_type=jnp.float32)
    for c in range(1, 3):
        z = z + jnp.dot(chunks[c], w_out_ref[c * H2p:(c + 1) * H2p, :],
                        preferred_element_type=jnp.float32)
    zo = z[:, 0:Out8] + vec_ref[14:15, 0:Out8]                # tiny writeback slab
    # Numerically stable sigmoid (no overflow for very negative logits).
    ez = jnp.exp(-jnp.abs(zo))
    o_ref[...] = jnp.where(zo >= 0.0,
                           1.0 / (1.0 + ez),
                           ez / (1.0 + ez)).astype(o_ref.dtype)


def _vmem_budget(batch, dims):
    """Derive vmem_limit_bytes from actual buffer sizes (with headroom)."""
    Dp, H0p, H1p, H2p = dims["Dp"], dims["H0p"], dims["H1p"], dims["H2p"]
    OutP, Out8, Fmax = dims["OutP"], dims["Out8"], dims["Fmax"]
    w_bytes = 2 * (Dp * H0p + 3 * H0p * 2 * H1p + 9 * H1p * 2 * H2p + 3 * H2p * OutP)
    vec_bytes = 4 * 16 * Fmax
    io_bytes = 2 * batch * Dp + 4 * batch * Out8
    # Generous live-activation estimate (f32 GEMM results + bf16 chunk copies).
    act_bytes = batch * (4 * (2 * H0p + 12 * H1p + 12 * H2p + 2 * OutP)
                         + 2 * (H0p + 3 * H1p + 3 * H2p))
    need = w_bytes + vec_bytes + io_bytes + act_bytes
    # 2x headroom, clamped to v7x's 64 MiB physical VMEM so one budget works on
    # v5e / v6e / v7x.  Bigger batches need a batch grid + two-pass BN.
    return int(min(max(32 * 1024 * 1024, 2 * need), 64 * 1024 * 1024))


def discriminator_forward(x, packed, output_size):
    """x: (B, input_size) f32/bf16.  packed: result of pack_params (reused across calls)."""
    batch, input_size = x.shape
    dims = packed["dims"]
    assert input_size <= dims["Dp"]
    # Single batch-scaled input: cast to bf16 (MXU LHS only) then pad lanes.
    x_pad = jnp.pad(x.astype(jnp.bfloat16), ((0, 0), (0, dims["Dp"] - input_size)))

    vmem = pl.BlockSpec(memory_space=pltpu.MemorySpace.VMEM)
    kernel = functools.partial(_discriminator_kernel,
                               H0p=dims["H0p"], H1p=dims["H1p"], H2p=dims["H2p"],
                               OutP=dims["OutP"], Out8=dims["Out8"])
    out = pl.pallas_call(
        kernel,
        out_shape=jax.ShapeDtypeStruct((batch, dims["Out8"]), jnp.float32),
        in_specs=[vmem] * 6,
        out_specs=vmem,
        compiler_params=pltpu.CompilerParams(
            vmem_limit_bytes=_vmem_budget(batch, dims)),
    )(x_pad, packed["w_in"], packed["w_mo0"], packed["w_mo1"],
      packed["w_out"], packed["vecs"])
    return out[:, :output_size]


# --------------------------------------------------------------------------
# Deterministic synthetic parameters (PyTorch layout) and pure-JAX reference.
# --------------------------------------------------------------------------
def init_params(key, input_size, hidden_size, output_size):
    H0, H1, H2 = hidden_size
    params = {}
    keys = iter(jax.random.split(key, 16))

    def linear_init(k, out_f, in_f):
        kw, kb = jax.random.split(k)
        s = 1.0 / jnp.sqrt(jnp.float32(in_f))
        w = jax.random.uniform(kw, (out_f, in_f), jnp.float32, -1.0, 1.0) * s
        b = jax.random.uniform(kb, (out_f,), jnp.float32, -1.0, 1.0) * s
        return w, b

    def bn_init(k, n):
        kg, kb = jax.random.split(k)
        return (1.0 + 0.1 * jax.random.normal(kg, (n,), jnp.float32),
                0.1 * jax.random.normal(kb, (n,), jnp.float32))

    params["w_in"], params["b_in"] = linear_init(next(keys), H0, input_size)
    params["g_in"], params["be_in"] = bn_init(next(keys), H0)
    for b, (in_f, hid) in enumerate([(H0, H1), (3 * H1, H2)]):
        for j in range(3):
            params[f"w_mo{b}_{j}"], params[f"b_mo{b}_{j}"] = linear_init(next(keys), 2 * hid, in_f)
            params[f"g_mo{b}_{j}"], params[f"be_mo{b}_{j}"] = bn_init(next(keys), 2 * hid)
    params["w_out"], params["b_out"] = linear_init(next(keys), output_size, 3 * H2)
    return params


def _reference_forward(x, params):
    """Pure-JAX f32 mirror of the PyTorch module (train-mode BN, dropout=identity)."""
    def bn_train(z, g, be):
        mean = jnp.mean(z, axis=0, keepdims=True)
        var = jnp.mean((z - mean) ** 2, axis=0, keepdims=True)
        return (z - mean) / jnp.sqrt(var + BN_EPS) * g + be

    h = x @ params["w_in"].T + params["b_in"]
    h = jnp.maximum(bn_train(h, params["g_in"], params["be_in"]), 0.0)
    for b in range(2):
        outs = []
        for j in range(3):
            z = h @ params[f"w_mo{b}_{j}"].T + params[f"b_mo{b}_{j}"]
            z = bn_train(z, params[f"g_mo{b}_{j}"], params[f"be_mo{b}_{j}"])
            z = z.reshape(z.shape[0], -1, 2).max(axis=2)   # maxout over pairs
            outs.append(z)                                 # dropout = identity
        h = jnp.concatenate(outs, axis=1)
    return jax.nn.sigmoid(h @ params["w_out"].T + params["b_out"])


if __name__ == "__main__":
    # Small shapes consistent with the module (defaults are 784/[512,256,128]/1).
    BATCH = 16                # multiple of 16 (bf16 sublane pack)
    INPUT_SIZE = 100          # pads to 128
    HIDDEN = [128, 64, 64]    # maxout dims pad to 128 (lane-dense)
    OUTPUT_SIZE = 1           # stored as 8 padded columns, sliced in wrapper

    key = jax.random.PRNGKey(0)
    k_x, k_p = jax.random.split(key)
    x = jax.random.normal(k_x, (BATCH, INPUT_SIZE), jnp.float32)
    params = init_params(k_p, INPUT_SIZE, HIDDEN, OUTPUT_SIZE)

    # Pack ONCE (hoisted out of the per-call path); reuse `packed` across calls.
    packed = pack_params(params, INPUT_SIZE, HIDDEN, OUTPUT_SIZE)
    packed = jax.tree_util.tree_map(
        lambda v: jax.block_until_ready(v) if isinstance(v, jax.Array) else v, packed)

    out = jax.block_until_ready(discriminator_forward(x, packed, OUTPUT_SIZE))
    ref = _reference_forward(x, params)

    assert out.shape == (BATCH, OUTPUT_SIZE)
    # Tolerance accounts for bf16 matmul operands in the kernel vs f32 reference.
    assert jnp.allclose(out, ref, atol=2e-2, rtol=2e-2), float(jnp.max(jnp.abs(out - ref)))
    print("KERNEL_OK")
</pallas_src>

<mosaic_0001>
module attributes {stable_mosaic.version = 11 : i64} {
  func.func @_discriminator_kernel(%arg0: memref<16x128xbf16, #tpu.memory_space<vmem>>, %arg1: memref<128x128xbf16, #tpu.memory_space<vmem>>, %arg2: memref<3x128x256xbf16, #tpu.memory_space<vmem>>, %arg3: memref<3x384x256xbf16, #tpu.memory_space<vmem>>, %arg4: memref<384x128xbf16, #tpu.memory_space<vmem>>, %arg5: memref<16x256xf32, #tpu.memory_space<vmem>>, %arg6: memref<16x8xf32, #tpu.memory_space<vmem>>) attributes {dimension_semantics = [], scalar_prefetch = 0 : i64, scratch_operands = 0 : i64, tpu.core_type = #tpu.core_type<tc>} {
    %c0 = arith.constant 0 : index
    %c0_0 = arith.constant 0 : index
    %0 = vector.load %arg0[%c0, %c0_0] : memref<16x128xbf16, #tpu.memory_space<vmem>>, vector<16x128xbf16>
    %c0_1 = arith.constant 0 : index
    %c0_2 = arith.constant 0 : index
    %1 = vector.load %arg1[%c0_1, %c0_2] : memref<128x128xbf16, #tpu.memory_space<vmem>>, vector<128x128xbf16>
    %cst = arith.constant dense<0.000000e+00> : vector<16x128xf32>
    %2 = tpu.matmul %0, %1, %cst {dimension_numbers = #tpu.dot_dimension_numbers<[1], [0], [0], [1], [0, 0, 1, 1], [], []>} : vector<16x128xbf16>, vector<128x128xbf16>, vector<16x128xf32> -> vector<16x128xf32>
    %c0_3 = arith.constant 0 : index
    %c0_4 = arith.constant 0 : index
    %3 = vector.load %arg5[%c0_3, %c0_4] : memref<16x256xf32, #tpu.memory_space<vmem>>, vector<1x128xf32>
    %c1 = arith.constant 1 : index
    %c0_5 = arith.constant 0 : index
    %4 = vector.load %arg5[%c1, %c0_5] : memref<16x256xf32, #tpu.memory_space<vmem>>, vector<1x128xf32>
    %cst_6 = arith.constant dense<0.000000e+00> : vector<128xf32>
    %5 = vector.multi_reduction <add>, %2, %cst_6 [0] : vector<16x128xf32> to vector<128xf32>
    %6 = vector.shape_cast %5 : vector<128xf32> to vector<1x128xf32>
    %cst_7 = arith.constant 1.600000e+01 : f32
    %7 = vector.broadcast %cst_7 : f32 to vector<1x128xf32>
    %8 = arith.divf %6, %7 : vector<1x128xf32>
    %9 = vector.broadcast %8 : vector<1x128xf32> to vector<16x128xf32>
    %10 = arith.subf %2, %9 : vector<16x128xf32>
    %11 = arith.mulf %10, %10 : vector<16x128xf32>
    %cst_8 = arith.constant dense<0.000000e+00> : vector<128xf32>
    %12 = vector.multi_reduction <add>, %11, %cst_8 [0] : vector<16x128xf32> to vector<128xf32>
    %13 = vector.shape_cast %12 : vector<128xf32> to vector<1x128xf32>
    %cst_9 = arith.constant 1.600000e+01 : f32
    %14 = vector.broadcast %cst_9 : f32 to vector<1x128xf32>
    %15 = arith.divf %13, %14 : vector<1x128xf32>
    %cst_10 = arith.constant 9.99999974E-6 : f32
    %16 = vector.broadcast %cst_10 : f32 to vector<1x128xf32>
    %17 = arith.addf %15, %16 : vector<1x128xf32>
    %18 = math.rsqrt %17 : vector<1x128xf32>
    %19 = arith.mulf %3, %18 : vector<1x128xf32>
    %20 = vector.broadcast %19 : vector<1x128xf32> to vector<16x128xf32>
    %21 = arith.mulf %10, %20 : vector<16x128xf32>
    %22 = vector.broadcast %4 : vector<1x128xf32> to vector<16x128xf32>
    %23 = arith.addf %21, %22 : vector<16x128xf32>
    %cst_11 = arith.constant 0.000000e+00 : f32
    %24 = vector.broadcast %cst_11 : f32 to vector<16x128xf32>
    %25 = arith.maximumf %23, %24 : vector<16x128xf32>
    %26 = arith.truncf %25 : vector<16x128xf32> to vector<16x128xbf16>
    %c0_12 = arith.constant 0 : index
    %c0_13 = arith.constant 0 : index
    %c0_14 = arith.constant 0 : index
    %27 = vector.load %arg2[%c0_12, %c0_13, %c0_14] : memref<3x128x256xbf16, #tpu.memory_space<vmem>>, vector<1x128x256xbf16>
    %28 = vector.shape_cast %27 : vector<1x128x256xbf16> to vector<128x256xbf16>
    %cst_15 = arith.constant dense<0.000000e+00> : vector<16x256xf32>
    %29 = tpu.matmul %26, %28, %cst_15 {dimension_numbers = #tpu.dot_dimension_numbers<[1], [0], [0], [1], [0, 0, 1, 1], [], []>} : vector<16x128xbf16>, vector<128x256xbf16>, vector<16x256xf32> -> vector<16x256xf32>
    %c2 = arith.constant 2 : index
    %c0_16 = arith.constant 0 : index
    %30 = vector.load %arg5[%c2, %c0_16] : memref<16x256xf32, #tpu.memory_space<vmem>>, vector<1x256xf32>
    %c3 = arith.constant 3 : index
    %c0_17 = arith.constant 0 : index
    %31 = vector.load %arg5[%c3, %c0_17] : memref<16x256xf32, #tpu.memory_space<vmem>>, vector<1x256xf32>
    %cst_18 = arith.constant dense<0.000000e+00> : vector<256xf32>
    %32 = vector.multi_reduction <add>, %29, %cst_18 [0] : vector<16x256xf32> to vector<256xf32>
    %33 = vector.shape_cast %32 : vector<256xf32> to vector<1x256xf32>
    %cst_19 = arith.constant 1.600000e+01 : f32
    %34 = vector.broadcast %cst_19 : f32 to vector<1x256xf32>
    %35 = arith.divf %33, %34 : vector<1x256xf32>
    %36 = vector.broadcast %35 : vector<1x256xf32> to vector<16x256xf32>
    %37 = arith.subf %29, %36 : vector<16x256xf32>
    %38 = arith.mulf %37, %37 : vector<16x256xf32>
    %cst_20 = arith.constant dense<0.000000e+00> : vector<256xf32>
    %39 = vector.multi_reduction <add>, %38, %cst_20 [0] : vector<16x256xf32> to vector<256xf32>
    %40 = vector.shape_cast %39 : vector<256xf32> to vector<1x256xf32>
    %cst_21 = arith.constant 1.600000e+01 : f32
    %41 = vector.broadcast %cst_21 : f32 to vector<1x256xf32>
    %42 = arith.divf %40, %41 : vector<1x256xf32>
    %cst_22 = arith.constant 9.99999974E-6 : f32
    %43 = vector.broadcast %cst_22 : f32 to vector<1x256xf32>
    %44 = arith.addf %42, %43 : vector<1x256xf32>
    %45 = math.rsqrt %44 : vector<1x256xf32>
    %46 = arith.mulf %30, %45 : vector<1x256xf32>
    %47 = vector.broadcast %46 : vector<1x256xf32> to vector<16x256xf32>
    %48 = arith.mulf %37, %47 : vector<16x256xf32>
    %49 = vector.broadcast %31 : vector<1x256xf32> to vector<16x256xf32>
    %50 = arith.addf %48, %49 : vector<16x256xf32>
    %51 = vector.extract_strided_slice %50 {offsets = [0, 0], sizes = [16, 128], strides = [1, 1]} : vector<16x256xf32> to vector<16x128xf32>
    %52 = vector.extract_strided_slice %50 {offsets = [0, 128], sizes = [16, 128], strides = [1, 1]} : vector<16x256xf32> to vector<16x128xf32>
    %53 = arith.maximumf %51, %52 : vector<16x128xf32>
    %54 = arith.truncf %53 : vector<16x128xf32> to vector<16x128xbf16>
    %c1_23 = arith.constant 1 : index
    %c0_24 = arith.constant 0 : index
    %c0_25 = arith.constant 0 : index
    %55 = vector.load %arg2[%c1_23, %c0_24, %c0_25] : memref<3x128x256xbf16, #tpu.memory_space<vmem>>, vector<1x128x256xbf16>
    %56 = vector.shape_cast %55 : vector<1x128x256xbf16> to vector<128x256xbf16>
    %cst_26 = arith.constant dense<0.000000e+00> : vector<16x256xf32>
    %57 = tpu.matmul %26, %56, %cst_26 {dimension_numbers = #tpu.dot_dimension_numbers<[1], [0], [0], [1], [0, 0, 1, 1], [], []>} : vector<16x128xbf16>, vector<128x256xbf16>, vector<16x256xf32> -> vector<16x256xf32>
    %c4 = arith.constant 4 : index
    %c0_27 = arith.constant 0 : index
    %58 = vector.load %arg5[%c4, %c0_27] : memref<16x256xf32, #tpu.memory_space<vmem>>, vector<1x256xf32>
    %c5 = arith.constant 5 : index
    %c0_28 = arith.constant 0 : index
    %59 = vector.load %arg5[%c5, %c0_28] : memref<16x256xf32, #tpu.memory_space<vmem>>, vector<1x256xf32>
    %cst_29 = arith.constant dense<0.000000e+00> : vector<256xf32>
    %60 = vector.multi_reduction <add>, %57, %cst_29 [0] : vector<16x256xf32> to vector<256xf32>
    %61 = vector.shape_cast %60 : vector<256xf32> to vector<1x256xf32>
    %cst_30 = arith.constant 1.600000e+01 : f32
    %62 = vector.broadcast %cst_30 : f32 to vector<1x256xf32>
    %63 = arith.divf %61, %62 : vector<1x256xf32>
    %64 = vector.broadcast %63 : vector<1x256xf32> to vector<16x256xf32>
    %65 = arith.subf %57, %64 : vector<16x256xf32>
    %66 = arith.mulf %65, %65 : vector<16x256xf32>
    %cst_31 = arith.constant dense<0.000000e+00> : vector<256xf32>
    %67 = vector.multi_reduction <add>, %66, %cst_31 [0] : vector<16x256xf32> to vector<256xf32>
    %68 = vector.shape_cast %67 : vector<256xf32> to vector<1x256xf32>
    %cst_32 = arith.constant 1.600000e+01 : f32
    %69 = vector.broadcast %cst_32 : f32 to vector<1x256xf32>
    %70 = arith.divf %68, %69 : vector<1x256xf32>
    %cst_33 = arith.constant 9.99999974E-6 : f32
    %71 = vector.broadcast %cst_33 : f32 to vector<1x256xf32>
    %72 = arith.addf %70, %71 : vector<1x256xf32>
    %73 = math.rsqrt %72 : vector<1x256xf32>
    %74 = arith.mulf %58, %73 : vector<1x256xf32>
    %75 = vector.broadcast %74 : vector<1x256xf32> to vector<16x256xf32>
    %76 = arith.mulf %65, %75 : vector<16x256xf32>
    %77 = vector.broadcast %59 : vector<1x256xf32> to vector<16x256xf32>
    %78 = arith.addf %76, %77 : vector<16x256xf32>
    %79 = vector.extract_strided_slice %78 {offsets = [0, 0], sizes = [16, 128], strides = [1, 1]} : vector<16x256xf32> to vector<16x128xf32>
    %80 = vector.extract_strided_slice %78 {offsets = [0, 128], sizes = [16, 128], strides = [1, 1]} : vector<16x256xf32> to vector<16x128xf32>
    %81 = arith.maximumf %79, %80 : vector<16x128xf32>
    %82 = arith.truncf %81 : vector<16x128xf32> to vector<16x128xbf16>
    %c2_34 = arith.constant 2 : index
    %c0_35 = arith.constant 0 : index
    %c0_36 = arith.constant 0 : index
    %83 = vector.load %arg2[%c2_34, %c0_35, %c0_36] : memref<3x128x256xbf16, #tpu.memory_space<vmem>>, vector<1x128x256xbf16>
    %84 = vector.shape_cast %83 : vector<1x128x256xbf16> to vector<128x256xbf16>
    %cst_37 = arith.constant dense<0.000000e+00> : vector<16x256xf32>
    %85 = tpu.matmul %26, %84, %cst_37 {dimension_numbers = #tpu.dot_dimension_numbers<[1], [0], [0], [1], [0, 0, 1, 1], [], []>} : vector<16x128xbf16>, vector<128x256xbf16>, vector<16x256xf32> -> vector<16x256xf32>
    %c6 = arith.constant 6 : index
    %c0_38 = arith.constant 0 : index
    %86 = vector.load %arg5[%c6, %c0_38] : memref<16x256xf32, #tpu.memory_space<vmem>>, vector<1x256xf32>
    %c7 = arith.constant 7 : index
    %c0_39 = arith.constant 0 : index
    %87 = vector.load %arg5[%c7, %c0_39] : memref<16x256xf32, #tpu.memory_space<vmem>>, vector<1x256xf32>
    %cst_40 = arith.constant dense<0.000000e+00> : vector<256xf32>
    %88 = vector.multi_reduction <add>, %85, %cst_40 [0] : vector<16x256xf32> to vector<256xf32>
    %89 = vector.shape_cast %88 : vector<256xf32> to vector<1x256xf32>
    %cst_41 = arith.constant 1.600000e+01 : f32
    %90 = vector.broadcast %cst_41 : f32 to vector<1x256xf32>
    %91 = arith.divf %89, %90 : vector<1x256xf32>
    %92 = vector.broadcast %91 : vector<1x256xf32> to vector<16x256xf32>
    %93 = arith.subf %85, %92 : vector<16x256xf32>
    %94 = arith.mulf %93, %93 : vector<16x256xf32>
    %cst_42 = arith.constant dense<0.000000e+00> : vector<256xf32>
    %95 = vector.multi_reduction <add>, %94, %cst_42 [0] : vector<16x256xf32> to vector<256xf32>
    %96 = vector.shape_cast %95 : vector<256xf32> to vector<1x256xf32>
    %cst_43 = arith.constant 1.600000e+01 : f32
    %97 = vector.broadcast %cst_43 : f32 to vector<1x256xf32>
    %98 = arith.divf %96, %97 : vector<1x256xf32>
    %cst_44 = arith.constant 9.99999974E-6 : f32
    %99 = vector.broadcast %cst_44 : f32 to vector<1x256xf32>
    %100 = arith.addf %98, %99 : vector<1x256xf32>
    %101 = math.rsqrt %100 : vector<1x256xf32>
    %102 = arith.mulf %86, %101 : vector<1x256xf32>
    %103 = vector.broadcast %102 : vector<1x256xf32> to vector<16x256xf32>
    %104 = arith.mulf %93, %103 : vector<16x256xf32>
    %105 = vector.broadcast %87 : vector<1x256xf32> to vector<16x256xf32>
    %106 = arith.addf %104, %105 : vector<16x256xf32>
    %107 = vector.extract_strided_slice %106 {offsets = [0, 0], sizes = [16, 128], strides = [1, 1]} : vector<16x256xf32> to vector<16x128xf32>
    %108 = vector.extract_strided_slice %106 {offsets = [0, 128], sizes = [16, 128], strides = [1, 1]} : vector<16x256xf32> to vector<16x128xf32>
    %109 = arith.maximumf %107, %108 : vector<16x128xf32>
    %110 = arith.truncf %109 : vector<16x128xf32> to vector<16x128xbf16>
    %c0_45 = arith.constant 0 : index
    %c0_46 = arith.constant 0 : index
    %c0_47 = arith.constant 0 : index
    %111 = vector.load %arg3[%c0_45, %c0_46, %c0_47] : memref<3x384x256xbf16, #tpu.memory_space<vmem>>, vector<1x128x256xbf16>
    %112 = vector.shape_cast %111 : vector<1x128x256xbf16> to vector<128x256xbf16>
    %cst_48 = arith.constant dense<0.000000e+00> : vector<16x256xf32>
    %113 = tpu.matmul %54, %112, %cst_48 {dimension_numbers = #tpu.dot_dimension_numbers<[1], [0], [0], [1], [0, 0, 1, 1], [], []>} : vector<16x128xbf16>, vector<128x256xbf16>, vector<16x256xf32> -> vector<16x256xf32>
    %c0_49 = arith.constant 0 : index
    %c128 = arith.constant 128 : index
    %c0_50 = arith.constant 0 : index
    %114 = vector.load %arg3[%c0_49, %c128, %c0_50] : memref<3x384x256xbf16, #tpu.memory_space<vmem>>, vector<1x128x256xbf16>
    %115 = vector.shape_cast %114 : vector<1x128x256xbf16> to vector<128x256xbf16>
    %cst_51 = arith.constant dense<0.000000e+00> : vector<16x256xf32>
    %116 = tpu.matmul %82, %115, %cst_51 {dimension_numbers = #tpu.dot_dimension_numbers<[1], [0], [0], [1], [0, 0, 1, 1], [], []>} : vector<16x128xbf16>, vector<128x256xbf16>, vector<16x256xf32> -> vector<16x256xf32>
    %117 = arith.addf %113, %116 : vector<16x256xf32>
    %c0_52 = arith.constant 0 : index
    %c256 = arith.constant 256 : index
    %c0_53 = arith.constant 0 : index
    %118 = vector.load %arg3[%c0_52, %c256, %c0_53] : memref<3x384x256xbf16, #tpu.memory_space<vmem>>, vector<1x128x256xbf16>
    %119 = vector.shape_cast %118 : vector<1x128x256xbf16> to vector<128x256xbf16>
    %cst_54 = arith.constant dense<0.000000e+00> : vector<16x256xf32>
    %120 = tpu.matmul %110, %119, %cst_54 {dimension_numbers = #tpu.dot_dimension_numbers<[1], [0], [0], [1], [0, 0, 1, 1], [], []>} : vector<16x128xbf16>, vector<128x256xbf16>, vector<16x256xf32> -> vector<16x256xf32>
    %121 = arith.addf %117, %120 : vector<16x256xf32>
    %c8 = arith.constant 8 : index
    %c0_55 = arith.constant 0 : index
    %122 = vector.load %arg5[%c8, %c0_55] : memref<16x256xf32, #tpu.memory_space<vmem>>, vector<1x256xf32>
    %c9 = arith.constant 9 : index
    %c0_56 = arith.constant 0 : index
    %123 = vector.load %arg5[%c9, %c0_56] : memref<16x256xf32, #tpu.memory_space<vmem>>, vector<1x256xf32>
    %cst_57 = arith.constant dense<0.000000e+00> : vector<256xf32>
    %124 = vector.multi_reduction <add>, %121, %cst_57 [0] : vector<16x256xf32> to vector<256xf32>
    %125 = vector.shape_cast %124 : vector<256xf32> to vector<1x256xf32>
    %cst_58 = arith.constant 1.600000e+01 : f32
    %126 = vector.broadcast %cst_58 : f32 to vector<1x256xf32>
    %127 = arith.divf %125, %126 : vector<1x256xf32>
    %128 = vector.broadcast %127 : vector<1x256xf32> to vector<16x256xf32>
    %129 = arith.subf %121, %128 : vector<16x256xf32>
    %130 = arith.mulf %129, %129 : vector<16x256xf32>
    %cst_59 = arith.constant dense<0.000000e+00> : vector<256xf32>
    %131 = vector.multi_reduction <add>, %130, %cst_59 [0] : vector<16x256xf32> to vector<256xf32>
    %132 = vector.shape_cast %131 : vector<256xf32> to vector<1x256xf32>
    %cst_60 = arith.constant 1.600000e+01 : f32
    %133 = vector.broadcast %cst_60 : f32 to vector<1x256xf32>
    %134 = arith.divf %132, %133 : vector<1x256xf32>
    %cst_61 = arith.constant 9.99999974E-6 : f32
    %135 = vector.broadcast %cst_61 : f32 to vector<1x256xf32>
    %136 = arith.addf %134, %135 : vector<1x256xf32>
    %137 = math.rsqrt %136 : vector<1x256xf32>
    %138 = arith.mulf %122, %137 : vector<1x256xf32>
    %139 = vector.broadcast %138 : vector<1x256xf32> to vector<16x256xf32>
    %140 = arith.mulf %129, %139 : vector<16x256xf32>
    %141 = vector.broadcast %123 : vector<1x256xf32> to vector<16x256xf32>
    %142 = arith.addf %140, %141 : vector<16x256xf32>
    %143 = vector.extract_strided_slice %142 {offsets = [0, 0], sizes = [16, 128], strides = [1, 1]} : vector<16x256xf32> to vector<16x128xf32>
    %144 = vector.extract_strided_slice %142 {offsets = [0, 128], sizes = [16, 128], strides = [1, 1]} : vector<16x256xf32> to vector<16x128xf32>
    %145 = arith.maximumf %143, %144 : vector<16x128xf32>
    %146 = arith.truncf %145 : vector<16x128xf32> to vector<16x128xbf16>
    %c1_62 = arith.constant 1 : index
    %c0_63 = arith.constant 0 : index
    %c0_64 = arith.constant 0 : index
    %147 = vector.load %arg3[%c1_62, %c0_63, %c0_64] : memref<3x384x256xbf16, #tpu.memory_space<vmem>>, vector<1x128x256xbf16>
    %148 = vector.shape_cast %147 : vector<1x128x256xbf16> to vector<128x256xbf16>
    %cst_65 = arith.constant dense<0.000000e+00> : vector<16x256xf32>
    %149 = tpu.matmul %54, %148, %cst_65 {dimension_numbers = #tpu.dot_dimension_numbers<[1], [0], [0], [1], [0, 0, 1, 1], [], []>} : vector<16x128xbf16>, vector<128x256xbf16>, vector<16x256xf32> -> vector<16x256xf32>
    %c1_66 = arith.constant 1 : index
    %c128_67 = arith.constant 128 : index
    %c0_68 = arith.constant 0 : index
    %150 = vector.load %arg3[%c1_66, %c128_67, %c0_68] : memref<3x384x256xbf16, #tpu.memory_space<vmem>>, vector<1x128x256xbf16>
    %151 = vector.shape_cast %150 : vector<1x128x256xbf16> to vector<128x256xbf16>
    %cst_69 = arith.constant dense<0.000000e+00> : vector<16x256xf32>
    %152 = tpu.matmul %82, %151, %cst_69 {dimension_numbers = #tpu.dot_dimension_numbers<[1], [0], [0], [1], [0, 0, 1, 1], [], []>} : vector<16x128xbf16>, vector<128x256xbf16>, vector<16x256xf32> -> vector<16x256xf32>
    %153 = arith.addf %149, %152 : vector<16x256xf32>
    %c1_70 = arith.constant 1 : index
    %c256_71 = arith.constant 256 : index
    %c0_72 = arith.constant 0 : index
    %154 = vector.load %arg3[%c1_70, %c256_71, %c0_72] : memref<3x384x256xbf16, #tpu.memory_space<vmem>>, vector<1x128x256xbf16>
    %155 = vector.shape_cast %154 : vector<1x128x256xbf16> to vector<128x256xbf16>
    %cst_73 = arith.constant dense<0.000000e+00> : vector<16x256xf32>
    %156 = tpu.matmul %110, %155, %cst_73 {dimension_numbers = #tpu.dot_dimension_numbers<[1], [0], [0], [1], [0, 0, 1, 1], [], []>} : vector<16x128xbf16>, vector<128x256xbf16>, vector<16x256xf32> -> vector<16x256xf32>
    %157 = arith.addf %153, %156 : vector<16x256xf32>
    %c10 = arith.constant 10 : index
    %c0_74 = arith.constant 0 : index
    %158 = vector.load %arg5[%c10, %c0_74] : memref<16x256xf32, #tpu.memory_space<vmem>>, vector<1x256xf32>
    %c11 = arith.constant 11 : index
    %c0_75 = arith.constant 0 : index
    %159 = vector.load %arg5[%c11, %c0_75] : memref<16x256xf32, #tpu.memory_space<vmem>>, vector<1x256xf32>
    %cst_76 = arith.constant dense<0.000000e+00> : vector<256xf32>
    %160 = vector.multi_reduction <add>, %157, %cst_76 [0] : vector<16x256xf32> to vector<256xf32>
    %161 = vector.shape_cast %160 : vector<256xf32> to vector<1x256xf32>
    %cst_77 = arith.constant 1.600000e+01 : f32
    %162 = vector.broadcast %cst_77 : f32 to vector<1x256xf32>
    %163 = arith.divf %161, %162 : vector<1x256xf32>
    %164 = vector.broadcast %163 : vector<1x256xf32> to vector<16x256xf32>
    %165 = arith.subf %157, %164 : vector<16x256xf32>
    %166 = arith.mulf %165, %165 : vector<16x256xf32>
    %cst_78 = arith.constant dense<0.000000e+00> : vector<256xf32>
    %167 = vector.multi_reduction <add>, %166, %cst_78 [0] : vector<16x256xf32> to vector<256xf32>
    %168 = vector.shape_cast %167 : vector<256xf32> to vector<1x256xf32>
    %cst_79 = arith.constant 1.600000e+01 : f32
    %169 = vector.broadcast %cst_79 : f32 to vector<1x256xf32>
    %170 = arith.divf %168, %169 : vector<1x256xf32>
    %cst_80 = arith.constant 9.99999974E-6 : f32
    %171 = vector.broadcast %cst_80 : f32 to vector<1x256xf32>
    %172 = arith.addf %170, %171 : vector<1x256xf32>
    %173 = math.rsqrt %172 : vector<1x256xf32>
    %174 = arith.mulf %158, %173 : vector<1x256xf32>
    %175 = vector.broadcast %174 : vector<1x256xf32> to vector<16x256xf32>
    %176 = arith.mulf %165, %175 : vector<16x256xf32>
    %177 = vector.broadcast %159 : vector<1x256xf32> to vector<16x256xf32>
    %178 = arith.addf %176, %177 : vector<16x256xf32>
    %179 = vector.extract_strided_slice %178 {offsets = [0, 0], sizes = [16, 128], strides = [1, 1]} : vector<16x256xf32> to vector<16x128xf32>
    %180 = vector.extract_strided_slice %178 {offsets = [0, 128], sizes = [16, 128], strides = [1, 1]} : vector<16x256xf32> to vector<16x128xf32>
    %181 = arith.maximumf %179, %180 : vector<16x128xf32>
    %182 = arith.truncf %181 : vector<16x128xf32> to vector<16x128xbf16>
    %c2_81 = arith.constant 2 : index
    %c0_82 = arith.constant 0 : index
    %c0_83 = arith.constant 0 : index
    %183 = vector.load %arg3[%c2_81, %c0_82, %c0_83] : memref<3x384x256xbf16, #tpu.memory_space<vmem>>, vector<1x128x256xbf16>
    %184 = vector.shape_cast %183 : vector<1x128x256xbf16> to vector<128x256xbf16>
    %cst_84 = arith.constant dense<0.000000e+00> : vector<16x256xf32>
    %185 = tpu.matmul %54, %184, %cst_84 {dimension_numbers = #tpu.dot_dimension_numbers<[1], [0], [0], [1], [0, 0, 1, 1], [], []>} : vector<16x128xbf16>, vector<128x256xbf16>, vector<16x256xf32> -> vector<16x256xf32>
    %c2_85 = arith.constant 2 : index
    %c128_86 = arith.constant 128 : index
    %c0_87 = arith.constant 0 : index
    %186 = vector.load %arg3[%c2_85, %c128_86, %c0_87] : memref<3x384x256xbf16, #tpu.memory_space<vmem>>, vector<1x128x256xbf16>
    %187 = vector.shape_cast %186 : vector<1x128x256xbf16> to vector<128x256xbf16>
    %cst_88 = arith.constant dense<0.000000e+00> : vector<16x256xf32>
    %188 = tpu.matmul %82, %187, %cst_88 {dimension_numbers = #tpu.dot_dimension_numbers<[1], [0], [0], [1], [0, 0, 1, 1], [], []>} : vector<16x128xbf16>, vector<128x256xbf16>, vector<16x256xf32> -> vector<16x256xf32>
    %189 = arith.addf %185, %188 : vector<16x256xf32>
    %c2_89 = arith.constant 2 : index
    %c256_90 = arith.constant 256 : index
    %c0_91 = arith.constant 0 : index
    %190 = vector.load %arg3[%c2_89, %c256_90, %c0_91] : memref<3x384x256xbf16, #tpu.memory_space<vmem>>, vector<1x128x256xbf16>
    %191 = vector.shape_cast %190 : vector<1x128x256xbf16> to vector<128x256xbf16>
    %cst_92 = arith.constant dense<0.000000e+00> : vector<16x256xf32>
    %192 = tpu.matmul %110, %191, %cst_92 {dimension_numbers = #tpu.dot_dimension_numbers<[1], [0], [0], [1], [0, 0, 1, 1], [], []>} : vector<16x128xbf16>, vector<128x256xbf16>, vector<16x256xf32> -> vector<16x256xf32>
    %193 = arith.addf %189, %192 : vector<16x256xf32>
    %c12 = arith.constant 12 : index
    %c0_93 = arith.constant 0 : index
    %194 = vector.load %arg5[%c12, %c0_93] : memref<16x256xf32, #tpu.memory_space<vmem>>, vector<1x256xf32>
    %c13 = arith.constant 13 : index
    %c0_94 = arith.constant 0 : index
    %195 = vector.load %arg5[%c13, %c0_94] : memref<16x256xf32, #tpu.memory_space<vmem>>, vector<1x256xf32>
    %cst_95 = arith.constant dense<0.000000e+00> : vector<256xf32>
    %196 = vector.multi_reduction <add>, %193, %cst_95 [0] : vector<16x256xf32> to vector<256xf32>
    %197 = vector.shape_cast %196 : vector<256xf32> to vector<1x256xf32>
    %cst_96 = arith.constant 1.600000e+01 : f32
    %198 = vector.broadcast %cst_96 : f32 to vector<1x256xf32>
    %199 = arith.divf %197, %198 : vector<1x256xf32>
    %200 = vector.broadcast %199 : vector<1x256xf32> to vector<16x256xf32>
    %201 = arith.subf %193, %200 : vector<16x256xf32>
    %202 = arith.mulf %201, %201 : vector<16x256xf32>
    %cst_97 = arith.constant dense<0.000000e+00> : vector<256xf32>
    %203 = vector.multi_reduction <add>, %202, %cst_97 [0] : vector<16x256xf32> to vector<256xf32>
    %204 = vector.shape_cast %203 : vector<256xf32> to vector<1x256xf32>
    %cst_98 = arith.constant 1.600000e+01 : f32
    %205 = vector.broadcast %cst_98 : f32 to vector<1x256xf32>
    %206 = arith.divf %204, %205 : vector<1x256xf32>
    %cst_99 = arith.constant 9.99999974E-6 : f32
    %207 = vector.broadcast %cst_99 : f32 to vector<1x256xf32>
    %208 = arith.addf %206, %207 : vector<1x256xf32>
    %209 = math.rsqrt %208 : vector<1x256xf32>
    %210 = arith.mulf %194, %209 : vector<1x256xf32>
    %211 = vector.broadcast %210 : vector<1x256xf32> to vector<16x256xf32>
    %212 = arith.mulf %201, %211 : vector<16x256xf32>
    %213 = vector.broadcast %195 : vector<1x256xf32> to vector<16x256xf32>
    %214 = arith.addf %212, %213 : vector<16x256xf32>
    %215 = vector.extract_strided_slice %214 {offsets = [0, 0], sizes = [16, 128], strides = [1, 1]} : vector<16x256xf32> to vector<16x128xf32>
    %216 = vector.extract_strided_slice %214 {offsets = [0, 128], sizes = [16, 128], strides = [1, 1]} : vector<16x256xf32> to vector<16x128xf32>
    %217 = arith.maximumf %215, %216 : vector<16x128xf32>
    %218 = arith.truncf %217 : vector<16x128xf32> to vector<16x128xbf16>
    %c0_100 = arith.constant 0 : index
    %c0_101 = arith.constant 0 : index
    %219 = vector.load %arg4[%c0_100, %c0_101] : memref<384x128xbf16, #tpu.memory_space<vmem>>, vector<128x128xbf16>
    %cst_102 = arith.constant dense<0.000000e+00> : vector<16x128xf32>
    %220 = tpu.matmul %146, %219, %cst_102 {dimension_numbers = #tpu.dot_dimension_numbers<[1], [0], [0], [1], [0, 0, 1, 1], [], []>} : vector<16x128xbf16>, vector<128x128xbf16>, vector<16x128xf32> -> vector<16x128xf32>
    %c128_103 = arith.constant 128 : index
    %c0_104 = arith.constant 0 : index
    %221 = vector.load %arg4[%c128_103, %c0_104] : memref<384x128xbf16, #tpu.memory_space<vmem>>, vector<128x128xbf16>
    %cst_105 = arith.constant dense<0.000000e+00> : vector<16x128xf32>
    %222 = tpu.matmul %182, %221, %cst_105 {dimension_numbers = #tpu.dot_dimension_numbers<[1], [0], [0], [1], [0, 0, 1, 1], [], []>} : vector<16x128xbf16>, vector<128x128xbf16>, vector<16x128xf32> -> vector<16x128xf32>
    %223 = arith.addf %220, %222 : vector<16x128xf32>
    %c256_106 = arith.constant 256 : index
    %c0_107 = arith.constant 0 : index
    %224 = vector.load %arg4[%c256_106, %c0_107] : memref<384x128xbf16, #tpu.memory_space<vmem>>, vector<128x128xbf16>
    %cst_108 = arith.constant dense<0.000000e+00> : vector<16x128xf32>
    %225 = tpu.matmul %218, %224, %cst_108 {dimension_numbers = #tpu.dot_dimension_numbers<[1], [0], [0], [1], [0, 0, 1, 1], [], []>} : vector<16x128xbf16>, vector<128x128xbf16>, vector<16x128xf32> -> vector<16x128xf32>
    %226 = arith.addf %223, %225 : vector<16x128xf32>
    %227 = vector.extract_strided_slice %226 {offsets = [0, 0], sizes = [16, 8], strides = [1, 1]} : vector<16x128xf32> to vector<16x8xf32>
    %c14 = arith.constant 14 : index
    %c0_109 = arith.constant 0 : index
    %228 = vector.load %arg5[%c14, %c0_109] : memref<16x256xf32, #tpu.memory_space<vmem>>, vector<1x8xf32>
    %229 = vector.broadcast %228 : vector<1x8xf32> to vector<16x8xf32>
    %230 = arith.addf %227, %229 : vector<16x8xf32>
    %231 = math.absf %230 : vector<16x8xf32>
    %cst_110 = arith.constant 0.000000e+00 : f32
    %232 = vector.broadcast %cst_110 : f32 to vector<16x8xf32>
    %233 = arith.subf %232, %231 : vector<16x8xf32>
    %234 = math.exp %233 : vector<16x8xf32>
    %cst_111 = arith.constant 0.000000e+00 : f32
    %235 = vector.broadcast %cst_111 : f32 to vector<16x8xf32>
    %236 = arith.cmpf oge, %230, %235 : vector<16x8xf32>
    %cst_112 = arith.constant 1.000000e+00 : f32
    %237 = vector.broadcast %cst_112 : f32 to vector<16x8xf32>
    %238 = arith.addf %237, %234 : vector<16x8xf32>
    %cst_113 = arith.constant 1.000000e+00 : f32
    %239 = vector.broadcast %cst_113 : f32 to vector<16x8xf32>
    %240 = arith.divf %239, %238 : vector<16x8xf32>
    %cst_114 = arith.constant 1.000000e+00 : f32
    %241 = vector.broadcast %cst_114 : f32 to vector<16x8xf32>
    %242 = arith.addf %241, %234 : vector<16x8xf32>
    %243 = arith.divf %234, %242 : vector<16x8xf32>
    %244 = arith.select %236, %240, %243 : vector<16x8xi1>, vector<16x8xf32>
    %c0_115 = arith.constant 0 : index
    %c0_116 = arith.constant 0 : index
    %245 = vector.load %arg6[%c0_115, %c0_116] : memref<16x8xf32, #tpu.memory_space<vmem>>, vector<16x8xf32>
    tpu.vector_store %arg6[%c0_115, %c0_116], %244 {strides = array<i32>} : memref<16x8xf32, #tpu.memory_space<vmem>>, vector<16x8xf32>,
    return
  }
}

</mosaic_0001>

<llo_original>
// kernel: tpu_custom_call.1
$region0: #{tpu_custom_call.1}
  #allocation0 [shape = 'u32[]', space=smem, size = 0x4, offset = 0x4, fixed_abs, tag = 'smem constant byte address 0x4 - core index']
  #allocation1 [shape = 'u32[144,128]{1,0:T(1,128)}', space=vmem, size = 0x12000, scoped, tag = 'internal scratch']
  %s0 = inlined_call_operand.hbm [shape: bf16[16,128], index: 0, kind: input, shape index: {}]
  %s1 = inlined_call_operand.hbm [shape: bf16[128,128], index: 1, kind: input, shape index: {}]
  %s2 = inlined_call_operand.hbm [shape: bf16[3,128,256], index: 2, kind: input, shape index: {}]
  %s3 = inlined_call_operand.hbm [shape: bf16[3,384,256], index: 3, kind: input, shape index: {}]
  %s4 = inlined_call_operand.hbm [shape: bf16[384,128], index: 4, kind: input, shape index: {}]
  %s5 = inlined_call_operand.hbm [shape: f32[16,256], index: 5, kind: input, shape index: {}]
  %s6 = inlined_call_operand.vmem [shape: f32[16,8], index: 6, kind: output, shape index: {}]
  %s7 = sld [smem:[#allocation0]]
  $region58: #{tpu_custom_call.1} parent=0
    _
  %s9 = ssub.s32 1, %s7
  %s10 = scalar_select 0, %s9, %s7
  $region1: #{tpu_custom_call.1} parent=0
    #allocation2 [shape = 'u8[4096]{0}', space=vmem, size = 0x1000, scoped, tag = 'input window, operand 0, single buffered']
    #allocation3 [shape = 's32[1]{0}', space=sflag, size = 0x4, scoped, tag = 'scoped memory for tpu_custom_call.1']
    #allocation4 [shape = 'u8[32768]{0}', space=vmem, size = 0x8000, scoped, tag = 'input window, operand 1, single buffered']
    #allocation5 [shape = 's32[1]{0}', space=sflag, size = 0x4, scoped, tag = 'scoped memory for tpu_custom_call.1']
    #allocation6 [shape = 'u8[196608]{0}', space=vmem, size = 0x30000, scoped, tag = 'input window, operand 2, single buffered']
    #allocation7 [shape = 'u8[589824]{0}', space=vmem, size = 0x90000, scoped, tag = 'input window, operand 3, single buffered']
    #allocation8 [shape = 's32[1]{0}', space=sflag, size = 0x4, scoped, tag = 'scoped memory for tpu_custom_call.1']
    #allocation9 [shape = 'u8[98304]{0}', space=vmem, size = 0x18000, scoped, tag = 'input window, operand 4, single buffered']
    #allocation10 [shape = 'u8[16384]{0}', space=vmem, size = 0x4000, scoped, tag = 'input window, operand 5, single buffered']
    #allocation11 [shape = 's32[1]{0}', space=sflag, size = 0x4, scoped, tag = 'scoped memory for tpu_custom_call.1']
    %11 = vsyncpa [#allocation3], 0
    %12 = vsyncpa [#allocation5], 0
    %13 = vsyncpa [#allocation8], 0
    %14 = vsyncpa [#allocation11], 0
    // Predicated region
    $region2: #{tpu_custom_call.1} parent=1 // pred_check
      _
    $region3: #{tpu_custom_call.1} parent=1 // pred_check_branch
      %16 = sbr.rel (0) target = $region5
    $region4: #{tpu_custom_call.1} parent=1 // pred_region
      %s18 = ssub.s32 128, 128
      %19 = vsyncadd [#allocation3], %s18
      %s20 = sshll.u32 [#allocation2], 4
      %s21 = int_to_ptr.vmem [resolvable:$true] %s20
      %26 = dma.hbm_to_vmem [thread:$0]  %s0, 128, %s21, [#allocation3], 64, 64, 4
    $region5: #{tpu_custom_call.1} parent=1 // pred_fallthru
      _
    // Predicated region
    $region6: #{tpu_custom_call.1} parent=1 // pred_check
      _
    $region7: #{tpu_custom_call.1} parent=1 // pred_check_branch
      %28 = sbr.rel (0) target = $region9
    $region8: #{tpu_custom_call.1} parent=1 // pred_region
      %s30 = ssub.s32 1024, 1024
      %31 = vsyncadd [#allocation5], %s30
      %s32 = sshll.u32 [#allocation4], 4
      %s33 = int_to_ptr.vmem [resolvable:$true] %s32
      %38 = dma.hbm_to_vmem [thread:$0]  %s1, 1024, %s33, [#allocation5], 64, 64, 4
    $region9: #{tpu_custom_call.1} parent=1 // pred_fallthru
      _
    // Predicated region
    $region10: #{tpu_custom_call.1} parent=1 // pred_check
      _
    $region11: #{tpu_custom_call.1} parent=1 // pred_check_branch
      %40 = sbr.rel (0) target = $region13
    $region12: #{tpu_custom_call.1} parent=1 // pred_region
      %s42 = ssub.s32 6144, 6144
      %43 = vsyncadd [#allocation5], %s42
      %s44 = sshll.u32 [#allocation6], 4
      %s45 = int_to_ptr.vmem [resolvable:$true] %s44
      %50 = dma.hbm_to_vmem [thread:$0]  %s2, 6144, %s45, [#allocation5], 128, 128, 8
    $region13: #{tpu_custom_call.1} parent=1 // pred_fallthru
      _
    // Predicated region
    $region14: #{tpu_custom_call.1} parent=1 // pred_check
      _
    $region15: #{tpu_custom_call.1} parent=1 // pred_check_branch
      %52 = sbr.rel (0) target = $region17
    $region16: #{tpu_custom_call.1} parent=1 // pred_region
      %s54 = ssub.s32 18432, 18432
      %55 = vsyncadd [#allocation8], %s54
      %s56 = sshll.u32 [#allocation7], 4
      %s57 = int_to_ptr.vmem [resolvable:$true] %s56
      %62 = dma.hbm_to_vmem [thread:$0]  %s3, 18432, %s57, [#allocation8], 128, 128, 8
    $region17: #{tpu_custom_call.1} parent=1 // pred_fallthru
      _
    // Predicated region
    $region18: #{tpu_custom_call.1} parent=1 // pred_check
      _
    $region19: #{tpu_custom_call.1} parent=1 // pred_check_branch
      %64 = sbr.rel (0) target = $region21
    $region20: #{tpu_custom_call.1} parent=1 // pred_region
      %s66 = ssub.s32 3072, 3072
      %67 = vsyncadd [#allocation8], %s66
      %s68 = sshll.u32 [#allocation9], 4
      %s69 = int_to_ptr.vmem [resolvable:$true] %s68
      %74 = dma.hbm_to_vmem [thread:$0]  %s4, 3072, %s69, [#allocation8], 64, 64, 4
    $region21: #{tpu_custom_call.1} parent=1 // pred_fallthru
      _
    // Predicated region
    $region22: #{tpu_custom_call.1} parent=1 // pred_check
      _
    $region23: #{tpu_custom_call.1} parent=1 // pred_check_branch
      %76 = sbr.rel (0) target = $region25
    $region24: #{tpu_custom_call.1} parent=1 // pred_region
      %s78 = ssub.s32 512, 512
      %79 = vsyncadd [#allocation11], %s78
      %s80 = sshll.u32 [#allocation10], 4
      %s81 = int_to_ptr.vmem [resolvable:$true] %s80
      %86 = dma.hbm_to_vmem [thread:$0]  %s5, 512, %s81, [#allocation11], 256, 256, 16
    $region25: #{tpu_custom_call.1} parent=1 // pred_fallthru
      _
    // Predicated region
    $region26: #{tpu_custom_call.1} parent=1 // pred_check
      _
    $region27: #{tpu_custom_call.1} parent=1 // pred_check_branch
      %88 = sbr.rel (0) target = $region29
    $region28: #{tpu_custom_call.1} parent=1 // pred_region
      %89 = dma.done [#allocation3], 128
    $region29: #{tpu_custom_call.1} parent=1 // pred_fallthru
      _
    // Predicated region
    $region30: #{tpu_custom_call.1} parent=1 // pred_check
      _
    $region31: #{tpu_custom_call.1} parent=1 // pred_check_branch
      %91 = sbr.rel (0) target = $region33
    $region32: #{tpu_custom_call.1} parent=1 // pred_region
      %92 = dma.done [#allocation5], 1024
    $region33: #{tpu_custom_call.1} parent=1 // pred_fallthru
      _
    // Predicated region
    $region34: #{tpu_custom_call.1} parent=1 // pred_check
      _
    $region35: #{tpu_custom_call.1} parent=1 // pred_check_branch
      %94 = sbr.rel (0) target = $region37
    $region36: #{tpu_custom_call.1} parent=1 // pred_region
      %95 = dma.done [#allocation5], 6144
    $region37: #{tpu_custom_call.1} parent=1 // pred_fallthru
      _
    // Predicated region
    $region38: #{tpu_custom_call.1} parent=1 // pred_check
      _
    $region39: #{tpu_custom_call.1} parent=1 // pred_check_branch
      %97 = sbr.rel (0) target = $region41
    $region40: #{tpu_custom_call.1} parent=1 // pred_region
      %98 = dma.done [#allocation8], 18432
    $region41: #{tpu_custom_call.1} parent=1 // pred_fallthru
      _
    // Predicated region
    $region42: #{tpu_custom_call.1} parent=1 // pred_check
      _
    $region43: #{tpu_custom_call.1} parent=1 // pred_check_branch
      %100 = sbr.rel (0) target = $region45
    $region44: #{tpu_custom_call.1} parent=1 // pred_region
      %101 = dma.done [#allocation8], 3072
    $region45: #{tpu_custom_call.1} parent=1 // pred_fallthru
      _
    // Predicated region
    $region46: #{tpu_custom_call.1} parent=1 // pred_check
      _
    $region47: #{tpu_custom_call.1} parent=1 // pred_check_branch
      %103 = sbr.rel (0) target = $region49
    $region48: #{tpu_custom_call.1} parent=1 // pred_region
      %104 = dma.done [#allocation11], 512
    $region49: #{tpu_custom_call.1} parent=1 // pred_fallthru
      _
    %v106 = vld [vmem:[#allocation2] sm:$0xf]
    %v107 = vld [vmem:[#allocation2 + $0x4] sm:$0xf]
    %v108 = vld [vmem:[#allocation4] sm:$0xf]
    %v109 = vld [vmem:[#allocation4 + $0x4] sm:$0xf]
    %v110 = vld [vmem:[#allocation4 + $0x8] sm:$0xf]
    %v111 = vld [vmem:[#allocation4 + $0xc] sm:$0xf]
    %v112 = vld [vmem:[#allocation4 + $0x10] sm:$0xf]
    %v113 = vld [vmem:[#allocation4 + $0x14] sm:$0xf]
    %v114 = vld [vmem:[#allocation4 + $0x18] sm:$0xf]
    %v115 = vld [vmem:[#allocation4 + $0x1c] sm:$0xf]
    %v116 = vld [vmem:[#allocation4 + $0x20] sm:$0xf]
    %v117 = vld [vmem:[#allocation4 + $0x24] sm:$0xf]
    %v118 = vld [vmem:[#allocation4 + $0x28] sm:$0xf]
    %v119 = vld [vmem:[#allocation4 + $0x2c] sm:$0xf]
    %v120 = vld [vmem:[#allocation4 + $0x30] sm:$0xf]
    %v121 = vld [vmem:[#allocation4 + $0x34] sm:$0xf]
    %v122 = vld [vmem:[#allocation4 + $0x38] sm:$0xf]
    %v123 = vld [vmem:[#allocation4 + $0x3c] sm:$0xf]
    %v126 = vunpack.c.l.b16 %v106
    %v127 = vunpack.c.l.b16 %v107
    %v128 = vpack.c.b16 %v127, %v126
    %v146 = vunpack.c.l.b16 %v108
    %v147 = vunpack.c.l.b16 %v109
    %v148 = vunpack.c.l.b16 %v110
    %v149 = vunpack.c.l.b16 %v111
    %v150 = vunpack.c.l.b16 %v112
    %v151 = vunpack.c.l.b16 %v113
    %v152 = vunpack.c.l.b16 %v114
    %v153 = vunpack.c.l.b16 %v115
    %v154 = vunpack.c.l.b16 %v116
    %v155 = vunpack.c.l.b16 %v117
    %v156 = vunpack.c.l.b16 %v118
    %v157 = vunpack.c.l.b16 %v119
    %v158 = vunpack.c.l.b16 %v120
    %v159 = vunpack.c.l.b16 %v121
    %v160 = vunpack.c.l.b16 %v122
    %v161 = vunpack.c.l.b16 %v123
    %v162 = vpack.c.b16 %v147, %v146
    %v163 = vpack.c.b16 %v149, %v148
    %v164 = vpack.c.b16 %v151, %v150
    %v165 = vpack.c.b16 %v153, %v152
    %v166 = vpack.c.b16 %v155, %v154
    %v167 = vpack.c.b16 %v157, %v156
    %v168 = vpack.c.b16 %v159, %v158
    %v169 = vpack.c.b16 %v161, %v160
    %178 = vmatprep.subr.bf16.mxu0 0
    %179 = vmatpush1.bf16.msra.mxu0 %v162
    %180 = vmatprep.subr.bf16.mxu0 0
    %181 = vmatpush1.bf16.msra.mxu0 %v163
    %182 = vmatprep.subr.bf16.mxu0 0
    %183 = vmatpush1.bf16.msra.mxu0 %v164
    %184 = vmatprep.subr.bf16.mxu0 0
    %185 = vmatpush1.bf16.msra.mxu0 %v165
    %186 = vmatprep.subr.bf16.mxu0 0
    %187 = vmatpush1.bf16.msra.mxu0 %v166
    %188 = vmatprep.subr.bf16.mxu0 0
    %189 = vmatpush1.bf16.msra.mxu0 %v167
    %190 = vmatprep.subr.bf16.mxu0 0
    %191 = vmatpush1.bf16.msra.mxu0 %v168
    %192 = vmatprep.subr.bf16.mxu0 0
    %193 = vmatpush1.bf16.msra.mxu0 %v169
    %194 = vmatprep.subr.bf16.mxu0 0
    %195 = vmatpush1.bf16.msra.mxu0 0
    %196 = vmatprep.subr.bf16.mxu0 0
    %197 = vmatpush1.bf16.msra.mxu0 0
    %198 = vmatprep.subr.bf16.mxu0 0
    %199 = vmatpush1.bf16.msra.mxu0 0
    %200 = vmatprep.subr.bf16.mxu0 0
    %201 = vmatpush1.bf16.msra.mxu0 0
    %202 = vmatprep.subr.bf16.mxu0 0
    %203 = vmatpush1.bf16.msra.mxu0 0
    %204 = vmatprep.subr.bf16.mxu0 0
    %205 = vmatpush1.bf16.msra.mxu0 0
    %206 = vmatprep.subr.bf16.mxu0 0
    %207 = vmatpush1.bf16.msra.mxu0 0
    %208 = vmatprep.subr.bf16.mxu0 0
    %209 = vmatpush1.bf16.msra.mxu0 0
    %210 = vmatprep.mubr.bf16.mxu0 0
    %211 = vmatmul.mubr.bf16.gmra.mrb[0].mxu0 %v128
    %v212 = vpop.f32.mrb[0].mxu0
    %v213 = vadd.f32 0.0, %v212
    %v214 = vpop.f32.mrb[0].mxu0
    %v215 = vpop.f32.mrb[0].mxu0
    %v216 = vadd.f32 0.0, %v215
    %v217 = vpop.f32.mrb[0].mxu0
    %218 = vdwg.mxu0
    %v219 = vld [vmem:[#allocation10] ss:$0 sm:$0xff]
    %v220 = vld [vmem:[#allocation10 + $0x1] ss:$0 sm:$0xff]
    %v221 = vadd.f32 %v213, %v216
    %v222 = vrot.slane %v221, 4
    %v223 = vadd.f32 %v221, %v222
    %v224 = vrot.slane %v223, 2
    %v225 = vadd.f32 %v223, %v224
    %v226 = vrot.slane %v225, 1
    %v227 = vadd.f32 %v225, %v226
    %v228 = vrcp.pop 16.0
    %v229 = vmul.f32 %v227, %v228
    %v230 = vsub.f32 %v213, %v229
    %v231 = vsub.f32 %v216, %v229
    %v232 = vmul.f32 %v230, %v230
    %v233 = vmul.f32 %v231, %v231
    %v234 = vadd.f32 %v232, %v233
    %v235 = vrot.slane %v234, 4
    %v236 = vadd.f32 %v234, %v235
    %v237 = vrot.slane %v236, 2
    %v238 = vadd.f32 %v236, %v237
    %v239 = vrot.slane %v238, 1
    %v240 = vadd.f32 %v238, %v239
    %v241 = vmul.f32 %v240, %v228
    %v242 = vadd.f32 %v241, 1e-05
    %v243 = vrsqrt.pop %v242
    %v244 = vmul.f32 %v219, %v243
    %v245 = vmul.f32 %v230, %v244
    %v246 = vmul.f32 %v231, %v244
    %v247 = vadd.f32 %v245, %v220
    %v248 = vadd.f32 %v246, %v220
    %v249 = vmax.f32 %v247, 0.0
    %v250 = vmax.f32 %v248, 0.0
    %v251 = vpack.c.bf16 %v250, %v249
    %v252 = vld [vmem:[#allocation6] sm:$0xff]
    %v253 = vld [vmem:[#allocation6 + $0x8] sm:$0xff]
    %v254 = vld [vmem:[#allocation6 + $0x10] sm:$0xff]
    %v255 = vld [vmem:[#allocation6 + $0x18] sm:$0xff]
    %v256 = vld [vmem:[#allocation6 + $0x20] sm:$0xff]
    %v257 = vld [vmem:[#allocation6 + $0x28] sm:$0xff]
    %v258 = vld [vmem:[#allocation6 + $0x30] sm:$0xff]
    %v259 = vld [vmem:[#allocation6 + $0x38] sm:$0xff]
    %v260 = vld [vmem:[#allocation6 + $0x40] sm:$0xff]
    %v261 = vld [vmem:[#allocation6 + $0x48] sm:$0xff]
    %v262 = vld [vmem:[#allocation6 + $0x50] sm:$0xff]
    %v263 = vld [vmem:[#allocation6 + $0x58] sm:$0xff]
    %v264 = vld [vmem:[#allocation6 + $0x60] sm:$0xff]
    %v265 = vld [vmem:[#allocation6 + $0x68] sm:$0xff]
    %v266 = vld [vmem:[#allocation6 + $0x70] sm:$0xff]
    %v267 = vld [vmem:[#allocation6 + $0x78] sm:$0xff]
    %v284 = vunpack.c.l.b16 %v252
    %v285 = vunpack.c.h.b16 %v252
    %v286 = vunpack.c.l.b16 %v253
    %v287 = vunpack.c.h.b16 %v253
    %v288 = vunpack.c.l.b16 %v254
    %v289 = vunpack.c.h.b16 %v254
    %v290 = vunpack.c.l.b16 %v255
    %v291 = vunpack.c.h.b16 %v255
    %v292 = vunpack.c.l.b16 %v256
    %v293 = vunpack.c.h.b16 %v256
    %v294 = vunpack.c.l.b16 %v257
    %v295 = vunpack.c.h.b16 %v257
    %v296 = vunpack.c.l.b16 %v258
    %v297 = vunpack.c.h.b16 %v258
    %v298 = vunpack.c.l.b16 %v259
    %v299 = vunpack.c.h.b16 %v259
    %v300 = vunpack.c.l.b16 %v260
    %v301 = vunpack.c.h.b16 %v260
    %v302 = vunpack.c.l.b16 %v261
    %v303 = vunpack.c.h.b16 %v261
    %v304 = vunpack.c.l.b16 %v262
    %v305 = vunpack.c.h.b16 %v262
    %v306 = vunpack.c.l.b16 %v263
    %v307 = vunpack.c.h.b16 %v263
    %v308 = vunpack.c.l.b16 %v264
    %v309 = vunpack.c.h.b16 %v264
    %v310 = vunpack.c.l.b16 %v265
    %v311 = vunpack.c.h.b16 %v265
    %v312 = vunpack.c.l.b16 %v266
    %v313 = vunpack.c.h.b16 %v266
    %v314 = vunpack.c.l.b16 %v267
    %v315 = vunpack.c.h.b16 %v267
    %v316 = vpack.c.b16 %v286, %v284
    %v317 = vpack.c.b16 %v287, %v285
    %v318 = vpack.c.b16 %v290, %v288
    %v319 = vpack.c.b16 %v291, %v289
    %v320 = vpack.c.b16 %v294, %v292
    %v321 = vpack.c.b16 %v295, %v293
    %v322 = vpack.c.b16 %v298, %v296
    %v323 = vpack.c.b16 %v299, %v297
    %v324 = vpack.c.b16 %v302, %v300
    %v325 = vpack.c.b16 %v303, %v301
    %v326 = vpack.c.b16 %v306, %v304
    %v327 = vpack.c.b16 %v307, %v305
    %v328 = vpack.c.b16 %v310, %v308
    %v329 = vpack.c.b16 %v311, %v309
    %v330 = vpack.c.b16 %v314, %v312
    %v331 = vpack.c.b16 %v315, %v313
    %348 = vmatprep.subr.bf16.mxu0 %v317
    %349 = vmatpush1.bf16.msra.mxu0 %v316
    %350 = vmatprep.subr.bf16.mxu0 %v319
    %351 = vmatpush1.bf16.msra.mxu0 %v318
    %352 = vmatprep.subr.bf16.mxu0 %v321
    %353 = vmatpush1.bf16.msra.mxu0 %v320
    %354 = vmatprep.subr.bf16.mxu0 %v323
    %355 = vmatpush1.bf16.msra.mxu0 %v322
    %356 = vmatprep.subr.bf16.mxu0 %v325
    %357 = vmatpush1.bf16.msra.mxu0 %v324
    %358 = vmatprep.subr.bf16.mxu0 %v327
    %359 = vmatpush1.bf16.msra.mxu0 %v326
    %360 = vmatprep.subr.bf16.mxu0 %v329
    %361 = vmatpush1.bf16.msra.mxu0 %v328
    %362 = vmatprep.subr.bf16.mxu0 %v331
    %363 = vmatpush1.bf16.msra.mxu0 %v330
    %364 = vmatprep.subr.bf16.mxu0 0
    %365 = vmatpush1.bf16.msra.mxu0 0
    %366 = vmatprep.subr.bf16.mxu0 0
    %367 = vmatpush1.bf16.msra.mxu0 0
    %368 = vmatprep.subr.bf16.mxu0 0
    %369 = vmatpush1.bf16.msra.mxu0 0
    %370 = vmatprep.subr.bf16.mxu0 0
    %371 = vmatpush1.bf16.msra.mxu0 0
    %372 = vmatprep.subr.bf16.mxu0 0
    %373 = vmatpush1.bf16.msra.mxu0 0
    %374 = vmatprep.subr.bf16.mxu0 0
    %375 = vmatpush1.bf16.msra.mxu0 0
    %376 = vmatprep.subr.bf16.mxu0 0
    %377 = vmatpush1.bf16.msra.mxu0 0
    %378 = vmatprep.subr.bf16.mxu0 0
    %379 = vmatpush1.bf16.msra.mxu0 0
    %380 = vmatprep.mubr.bf16.mxu0 0
    %381 = vmatmul.mubr.bf16.gmra.mrb[0].mxu0 %v251
    %v382 = vpop.f32.mrb[0].mxu0
    %v383 = vadd.f32 0.0, %v382
    %v384 = vpop.f32.mrb[0].mxu0
    %v385 = vadd.f32 0.0, %v384
    %v386 = vpop.f32.mrb[0].mxu0
    %v387 = vadd.f32 0.0, %v386
    %v388 = vpop.f32.mrb[0].mxu0
    %v389 = vadd.f32 0.0, %v388
    %390 = vdwg.mxu0
    %s391 = scalar_lea.vmem [#allocation10], 2
    %v392 = vld [vmem:[%s391] ss:$8 sm:$0x3]
    %s393 = scalar_lea.vmem [#allocation10], 3
    %v394 = vld [vmem:[%s393] ss:$8 sm:$0x3]
    %v395 = vadd.f32 %v383, %v387
    %v396 = vrot.slane %v395, 4
    %v397 = vadd.f32 %v395, %v396
    %v398 = vrot.slane %v397, 2
    %v399 = vadd.f32 %v397, %v398
    %v400 = vrot.slane %v399, 1
    %v401 = vadd.f32 %v399, %v400
    %v402 = vadd.f32 %v385, %v389
    %v403 = vrot.slane %v402, 4
    %v404 = vadd.f32 %v402, %v403
    %v405 = vrot.slane %v404, 2
    %v406 = vadd.f32 %v404, %v405
    %v407 = vrot.slane %v406, 1
    %v408 = vadd.f32 %v406, %v407
    %v409 = vmul.f32 %v401, %v228
    %v410 = vmul.f32 %v408, %v228
    %v411 = vsub.f32 %v383, %v409
    %v412 = vsub.f32 %v385, %v410
    %v413 = vsub.f32 %v387, %v409
    %v414 = vsub.f32 %v389, %v410
    %v415 = vmul.f32 %v411, %v411
    %v416 = vmul.f32 %v412, %v412
    %v417 = vmul.f32 %v413, %v413
    %v418 = vmul.f32 %v414, %v414
    %v419 = vadd.f32 %v415, %v417
    %v420 = vrot.slane %v419, 4
    %v421 = vadd.f32 %v419, %v420
    %v422 = vrot.slane %v421, 2
    %v423 = vadd.f32 %v421, %v422
    %v424 = vrot.slane %v423, 1
    %v425 = vadd.f32 %v423, %v424
    %v426 = vadd.f32 %v416, %v418
    %v427 = vrot.slane %v426, 4
    %v428 = vadd.f32 %v426, %v427
    %v429 = vrot.slane %v428, 2
    %v430 = vadd.f32 %v428, %v429
    %v431 = vrot.slane %v430, 1
    %v432 = vadd.f32 %v430, %v431
    %v433 = vmul.f32 %v425, %v228
    %v434 = vmul.f32 %v432, %v228
    %v435 = vadd.f32 %v433, 1e-05
    %v436 = vadd.f32 %v434, 1e-05
    %v437 = vrsqrt.pop %v435
    %v438 = vrsqrt.pop %v436
    %v441 = vcombine.low %v437, %v438
    %v443 = vunpack.c.l.s4 1966171168
    %v444 = vunpack.c.0.s8 %v443
    %v445 = vlaneseq
    %v446 = vshrl.u32 %v445, 7
    %v447 = vsub.s32 %v444, %v446
    %v448 = vrot.slane %v441, %v447
    %v450 = vunpack.c.l.s4 1966171168
    %v451 = vunpack.c.0.s8 %v450
    %v452 = vlaneseq
    %v453 = vshrl.u32 %v452, 7
    %v454 = vsub.s32 %v451, %v453
    %v455 = vrot.slane %v448, %v454
    %v457 = vmul.f32 %v392, %v455
    %v459 = vlaneseq
    %v460 = vshrl.u32 %v459, 7
    %v461 = vsub.s32 0, %v460
    %v462 = vrot.slane %v457, %v461
    %v463 = vlaneseq
    %v464 = vshrl.u32 %v463, 7
    %v465 = vsub.s32 1, %v464
    %v466 = vrot.slane %v457, %v465
    %v469 = vmul.f32 %v411, %v462
    %v470 = vmul.f32 %v412, %v466
    %v471 = vmul.f32 %v413, %v462
    %v472 = vmul.f32 %v414, %v466
    %v474 = vlaneseq
    %v475 = vshrl.u32 %v474, 7
    %v476 = vsub.s32 0, %v475
    %v477 = vrot.slane %v394, %v476
    %v478 = vlaneseq
    %v479 = vshrl.u32 %v478, 7
    %v480 = vsub.s32 1, %v479
    %v481 = vrot.slane %v394, %v480
    %v484 = vadd.f32 %v469, %v477
    %v485 = vadd.f32 %v470, %v481
    %v486 = vadd.f32 %v471, %v477
    %v487 = vadd.f32 %v472, %v481
    %v488 = vmax.f32 %v484, %v485
    %v489 = vmax.f32 %v486, %v487
    %v490 = vpack.c.bf16 %v489, %v488
    %s491 = scalar_lea.vmem [#allocation6], 128
    %v492 = vld [vmem:[%s491] sm:$0xff]
    %v493 = vld [vmem:[%s491 + $0x8] sm:$0xff]
    %v494 = vld [vmem:[%s491 + $0x10] sm:$0xff]
    %v495 = vld [vmem:[%s491 + $0x18] sm:$0xff]
    %v496 = vld [vmem:[%s491 + $0x20] sm:$0xff]
    %v497 = vld [vmem:[%s491 + $0x28] sm:$0xff]
    %v498 = vld [vmem:[%s491 + $0x30] sm:$0xff]
    %v499 = vld [vmem:[%s491 + $0x38] sm:$0xff]
    %v500 = vld [vmem:[%s491 + $0x40] sm:$0xff]
    %v501 = vld [vmem:[%s491 + $0x48] sm:$0xff]
    %v502 = vld [vmem:[%s491 + $0x50] sm:$0xff]
    %v503 = vld [vmem:[%s491 + $0x58] sm:$0xff]
    %v504 = vld [vmem:[%s491 + $0x60] sm:$0xff]
    %v505 = vld [vmem:[%s491 + $0x68] sm:$0xff]
    %v506 = vld [vmem:[%s491 + $0x70] sm:$0xff]
    %v507 = vld [vmem:[%s491 + $0x78] sm:$0xff]
    %v524 = vunpack.c.l.b16 %v492
    %v525 = vunpack.c.h.b16 %v492
    %v526 = vunpack.c.l.b16 %v493
    %v527 = vunpack.c.h.b16 %v493
    %v528 = vunpack.c.l.b16 %v494
    %v529 = vunpack.c.h.b16 %v494
    %v530 = vunpack.c.l.b16 %v495
    %v531 = vunpack.c.h.b16 %v495
    %v532 = vunpack.c.l.b16 %v496
    %v533 = vunpack.c.h.b16 %v496
    %v534 = vunpack.c.l.b16 %v497
    %v535 = vunpack.c.h.b16 %v497
    %v536 = vunpack.c.l.b16 %v498
    %v537 = vunpack.c.h.b16 %v498
    %v538 = vunpack.c.l.b16 %v499
    %v539 = vunpack.c.h.b16 %v499
    %v540 = vunpack.c.l.b16 %v500
    %v541 = vunpack.c.h.b16 %v500
    %v542 = vunpack.c.l.b16 %v501
    %v543 = vunpack.c.h.b16 %v501
    %v544 = vunpack.c.l.b16 %v502
    %v545 = vunpack.c.h.b16 %v502
    %v546 = vunpack.c.l.b16 %v503
    %v547 = vunpack.c.h.b16 %v503
    %v548 = vunpack.c.l.b16 %v504
    %v549 = vunpack.c.h.b16 %v504
    %v550 = vunpack.c.l.b16 %v505
    %v551 = vunpack.c.h.b16 %v505
    %v552 = vunpack.c.l.b16 %v506
    %v553 = vunpack.c.h.b16 %v506
    %v554 = vunpack.c.l.b16 %v507
    %v555 = vunpack.c.h.b16 %v507
    %v556 = vpack.c.b16 %v526, %v524
    %v557 = vpack.c.b16 %v527, %v525
    %v558 = vpack.c.b16 %v530, %v528
    %v559 = vpack.c.b16 %v531, %v529
    %v560 = vpack.c.b16 %v534, %v532
    %v561 = vpack.c.b16 %v535, %v533
    %v562 = vpack.c.b16 %v538, %v536
    %v563 = vpack.c.b16 %v539, %v537
    %v564 = vpack.c.b16 %v542, %v540
    %v565 = vpack.c.b16 %v543, %v541
    %v566 = vpack.c.b16 %v546, %v544
    %v567 = vpack.c.b16 %v547, %v545
    %v568 = vpack.c.b16 %v550, %v548
    %v569 = vpack.c.b16 %v551, %v549
    %v570 = vpack.c.b16 %v554, %v552
    %v571 = vpack.c.b16 %v555, %v553
    %588 = vmatprep.subr.bf16.mxu0 %v557
    %589 = vmatpush1.bf16.msra.mxu0 %v556
    %590 = vmatprep.subr.bf16.mxu0 %v559
    %591 = vmatpush1.bf16.msra.mxu0 %v558
    %592 = vmatprep.subr.bf16.mxu0 %v561
    %593 = vmatpush1.bf16.msra.mxu0 %v560
    %594 = vmatprep.subr.bf16.mxu0 %v563
    %595 = vmatpush1.bf16.msra.mxu0 %v562
    %596 = vmatprep.subr.bf16.mxu0 %v565
    %597 = vmatpush1.bf16.msra.mxu0 %v564
    %598 = vmatprep.subr.bf16.mxu0 %v567
    %599 = vmatpush1.bf16.msra.mxu0 %v566
    %600 = vmatprep.subr.bf16.mxu0 %v569
    %601 = vmatpush1.bf16.msra.mxu0 %v568
    %602 = vmatprep.subr.bf16.mxu0 %v571
    %603 = vmatpush1.bf16.msra.mxu0 %v570
    %604 = vmatprep.subr.bf16.mxu0 0
    %605 = vmatpush1.bf16.msra.mxu0 0
    %606 = vmatprep.subr.bf16.mxu0 0
    %607 = vmatpush1.bf16.msra.mxu0 0
    %608 = vmatprep.subr.bf16.mxu0 0
    %609 = vmatpush1.bf16.msra.mxu0 0
    %610 = vmatprep.subr.bf16.mxu0 0
    %611 = vmatpush1.bf16.msra.mxu0 0
    %612 = vmatprep.subr.bf16.mxu0 0
    %613 = vmatpush1.bf16.msra.mxu0 0
    %614 = vmatprep.subr.bf16.mxu0 0
    %615 = vmatpush1.bf16.msra.mxu0 0
    %616 = vmatprep.subr.bf16.mxu0 0
    %617 = vmatpush1.bf16.msra.mxu0 0
    %618 = vmatprep.subr.bf16.mxu0 0
    %619 = vmatpush1.bf16.msra.mxu0 0
    %620 = vmatprep.mubr.bf16.mxu0 0
    %621 = vmatmul.mubr.bf16.gmra.mrb[0].mxu0 %v251
    %v622 = vpop.f32.mrb[0].mxu0
    %v623 = vadd.f32 0.0, %v622
    %v624 = vpop.f32.mrb[0].mxu0
    %v625 = vadd.f32 0.0, %v624
    %v626 = vpop.f32.mrb[0].mxu0
    %v627 = vadd.f32 0.0, %v626
    %v628 = vpop.f32.mrb[0].mxu0
    %v629 = vadd.f32 0.0, %v628
    %630 = vdwg.mxu0
    %s631 = scalar_lea.vmem [#allocation10], 4
    %v632 = vld [vmem:[%s631] ss:$8 sm:$0x3]
    %s633 = scalar_lea.vmem [#allocation10], 5
    %v634 = vld [vmem:[%s633] ss:$8 sm:$0x3]
    %v635 = vadd.f32 %v623, %v627
    %v636 = vrot.slane %v635, 4
    %v637 = vadd.f32 %v635, %v636
    %v638 = vrot.slane %v637, 2
    %v639 = vadd.f32 %v637, %v638
    %v640 = vrot.slane %v639, 1
    %v641 = vadd.f32 %v639, %v640
    %v642 = vadd.f32 %v625, %v629
    %v643 = vrot.slane %v642, 4
    %v644 = vadd.f32 %v642, %v643
    %v645 = vrot.slane %v644, 2
    %v646 = vadd.f32 %v644, %v645
    %v647 = vrot.slane %v646, 1
    %v648 = vadd.f32 %v646, %v647
    %v649 = vmul.f32 %v641, %v228
    %v650 = vmul.f32 %v648, %v228
    %v651 = vsub.f32 %v623, %v649
    %v652 = vsub.f32 %v625, %v650
    %v653 = vsub.f32 %v627, %v649
    %v654 = vsub.f32 %v629, %v650
    %v655 = vmul.f32 %v651, %v651
    %v656 = vmul.f32 %v652, %v652
    %v657 = vmul.f32 %v653, %v653
    %v658 = vmul.f32 %v654, %v654
    %v659 = vadd.f32 %v655, %v657
    %v660 = vrot.slane %v659, 4
    %v661 = vadd.f32 %v659, %v660
    %v662 = vrot.slane %v661, 2
    %v663 = vadd.f32 %v661, %v662
    %v664 = vrot.slane %v663, 1
    %v665 = vadd.f32 %v663, %v664
    %v666 = vadd.f32 %v656, %v658
    %v667 = vrot.slane %v666, 4
    %v668 = vadd.f32 %v666, %v667
    %v669 = vrot.slane %v668, 2
    %v670 = vadd.f32 %v668, %v669
    %v671 = vrot.slane %v670, 1
    %v672 = vadd.f32 %v670, %v671
    %v673 = vmul.f32 %v665, %v228
    %v674 = vmul.f32 %v672, %v228
    %v675 = vadd.f32 %v673, 1e-05
    %v676 = vadd.f32 %v674, 1e-05
    %v677 = vrsqrt.pop %v675
    %v678 = vrsqrt.pop %v676
    %v681 = vcombine.low %v677, %v678
    %v683 = vunpack.c.l.s4 1966171168
    %v684 = vunpack.c.0.s8 %v683
    %v685 = vlaneseq
    %v686 = vshrl.u32 %v685, 7
    %v687 = vsub.s32 %v684, %v686
    %v688 = vrot.slane %v681, %v687
    %v690 = vunpack.c.l.s4 1966171168
    %v691 = vunpack.c.0.s8 %v690
    %v692 = vlaneseq
    %v693 = vshrl.u32 %v692, 7
    %v694 = vsub.s32 %v691, %v693
    %v695 = vrot.slane %v688, %v694
    %v697 = vmul.f32 %v632, %v695
    %v699 = vlaneseq
    %v700 = vshrl.u32 %v699, 7
    %v701 = vsub.s32 0, %v700
    %v702 = vrot.slane %v697, %v701
    %v703 = vlaneseq
    %v704 = vshrl.u32 %v703, 7
    %v705 = vsub.s32 1, %v704
    %v706 = vrot.slane %v697, %v705
    %v709 = vmul.f32 %v651, %v702
    %v710 = vmul.f32 %v652, %v706
    %v711 = vmul.f32 %v653, %v702
    %v712 = vmul.f32 %v654, %v706
    %v714 = vlaneseq
    %v715 = vshrl.u32 %v714, 7
    %v716 = vsub.s32 0, %v715
    %v717 = vrot.slane %v634, %v716
    %v718 = vlaneseq
    %v719 = vshrl.u32 %v718, 7
    %v720 = vsub.s32 1, %v719
    %v721 = vrot.slane %v634, %v720
    %v724 = vadd.f32 %v709, %v717
    %v725 = vadd.f32 %v710, %v721
    %v726 = vadd.f32 %v711, %v717
    %v727 = vadd.f32 %v712, %v721
    %v728 = vmax.f32 %v724, %v725
    %v729 = vmax.f32 %v726, %v727
    %v730 = vpack.c.bf16 %v729, %v728
    %s731 = scalar_lea.vmem [#allocation6], 256
    %v732 = vld [vmem:[%s731] sm:$0xff]
    %v733 = vld [vmem:[%s731 + $0x8] sm:$0xff]
    %v734 = vld [vmem:[%s731 + $0x10] sm:$0xff]
    %v735 = vld [vmem:[%s731 + $0x18] sm:$0xff]
    %v736 = vld [vmem:[%s731 + $0x20] sm:$0xff]
    %v737 = vld [vmem:[%s731 + $0x28] sm:$0xff]
    %v738 = vld [vmem:[%s731 + $0x30] sm:$0xff]
    %v739 = vld [vmem:[%s731 + $0x38] sm:$0xff]
    %v740 = vld [vmem:[%s731 + $0x40] sm:$0xff]
    %v741 = vld [vmem:[%s731 + $0x48] sm:$0xff]
    %v742 = vld [vmem:[%s731 + $0x50] sm:$0xff]
    %v743 = vld [vmem:[%s731 + $0x58] sm:$0xff]
    %v744 = vld [vmem:[%s731 + $0x60] sm:$0xff]
    %v745 = vld [vmem:[%s731 + $0x68] sm:$0xff]
    %v746 = vld [vmem:[%s731 + $0x70] sm:$0xff]
    %v747 = vld [vmem:[%s731 + $0x78] sm:$0xff]
    %v764 = vunpack.c.l.b16 %v732
    %v765 = vunpack.c.h.b16 %v732
    %v766 = vunpack.c.l.b16 %v733
    %v767 = vunpack.c.h.b16 %v733
    %v768 = vunpack.c.l.b16 %v734
    %v769 = vunpack.c.h.b16 %v734
    %v770 = vunpack.c.l.b16 %v735
    %v771 = vunpack.c.h.b16 %v735
    %v772 = vunpack.c.l.b16 %v736
    %v773 = vunpack.c.h.b16 %v736
    %v774 = vunpack.c.l.b16 %v737
    %v775 = vunpack.c.h.b16 %v737
    %v776 = vunpack.c.l.b16 %v738
    %v777 = vunpack.c.h.b16 %v738
    %v778 = vunpack.c.l.b16 %v739
    %v779 = vunpack.c.h.b16 %v739
    %v780 = vunpack.c.l.b16 %v740
    %v781 = vunpack.c.h.b16 %v740
    %v782 = vunpack.c.l.b16 %v741
    %v783 = vunpack.c.h.b16 %v741
    %v784 = vunpack.c.l.b16 %v742
    %v785 = vunpack.c.h.b16 %v742
    %v786 = vunpack.c.l.b16 %v743
    %v787 = vunpack.c.h.b16 %v743
    %v788 = vunpack.c.l.b16 %v744
    %v789 = vunpack.c.h.b16 %v744
    %v790 = vunpack.c.l.b16 %v745
    %v791 = vunpack.c.h.b16 %v745
    %v792 = vunpack.c.l.b16 %v746
    %v793 = vunpack.c.h.b16 %v746
    %v794 = vunpack.c.l.b16 %v747
    %v795 = vunpack.c.h.b16 %v747
    %v796 = vpack.c.b16 %v766, %v764
    %v797 = vpack.c.b16 %v767, %v765
    %v798 = vpack.c.b16 %v770, %v768
    %v799 = vpack.c.b16 %v771, %v769
    %v800 = vpack.c.b16 %v774, %v772
    %v801 = vpack.c.b16 %v775, %v773
    %v802 = vpack.c.b16 %v778, %v776
    %v803 = vpack.c.b16 %v779, %v777
    %v804 = vpack.c.b16 %v782, %v780
    %v805 = vpack.c.b16 %v783, %v781
    %v806 = vpack.c.b16 %v786, %v784
    %v807 = vpack.c.b16 %v787, %v785
    %v808 = vpack.c.b16 %v790, %v788
    %v809 = vpack.c.b16 %v791, %v789
    %v810 = vpack.c.b16 %v794, %v792
    %v811 = vpack.c.b16 %v795, %v793
    %828 = vmatprep.subr.bf16.mxu0 %v797
    %829 = vmatpush1.bf16.msra.mxu0 %v796
    %830 = vmatprep.subr.bf16.mxu0 %v799
    %831 = vmatpush1.bf16.msra.mxu0 %v798
    %832 = vmatprep.subr.bf16.mxu0 %v801
    %833 = vmatpush1.bf16.msra.mxu0 %v800
    %834 = vmatprep.subr.bf16.mxu0 %v803
    %835 = vmatpush1.bf16.msra.mxu0 %v802
    %836 = vmatprep.subr.bf16.mxu0 %v805
    %837 = vmatpush1.bf16.msra.mxu0 %v804
    %838 = vmatprep.subr.bf16.mxu0 %v807
    %839 = vmatpush1.bf16.msra.mxu0 %v806
    %840 = vmatprep.subr.bf16.mxu0 %v809
    %841 = vmatpush1.bf16.msra.mxu0 %v808
    %842 = vmatprep.subr.bf16.mxu0 %v811
    %843 = vmatpush1.bf16.msra.mxu0 %v810
    %844 = vmatprep.subr.bf16.mxu0 0
    %845 = vmatpush1.bf16.msra.mxu0 0
    %846 = vmatprep.subr.bf16.mxu0 0
    %847 = vmatpush1.bf16.msra.mxu0 0
    %848 = vmatprep.subr.bf16.mxu0 0
    %849 = vmatpush1.bf16.msra.mxu0 0
    %850 = vmatprep.subr.bf16.mxu0 0
    %851 = vmatpush1.bf16.msra.mxu0 0
    %852 = vmatprep.subr.bf16.mxu0 0
    %853 = vmatpush1.bf16.msra.mxu0 0
    %854 = vmatprep.subr.bf16.mxu0 0
    %855 = vmatpush1.bf16.msra.mxu0 0
    %856 = vmatprep.subr.bf16.mxu0 0
    %857 = vmatpush1.bf16.msra.mxu0 0
    %858 = vmatprep.subr.bf16.mxu0 0
    %859 = vmatpush1.bf16.msra.mxu0 0
    %860 = vmatprep.mubr.bf16.mxu0 0
    %861 = vmatmul.mubr.bf16.gmra.mrb[0].mxu0 %v251
    %v862 = vpop.f32.mrb[0].mxu0
    %v863 = vadd.f32 0.0, %v862
    %v864 = vpop.f32.mrb[0].mxu0
    %v865 = vadd.f32 0.0, %v864
    %v866 = vpop.f32.mrb[0].mxu0
    %v867 = vadd.f32 0.0, %v866
    %v868 = vpop.f32.mrb[0].mxu0
    %v869 = vadd.f32 0.0, %v868
    %870 = vdwg.mxu0
    %s871 = scalar_lea.vmem [#allocation10], 6
    %v872 = vld [vmem:[%s871] ss:$8 sm:$0x3]
    %s873 = scalar_lea.vmem [#allocation10], 7
    %v874 = vld [vmem:[%s873] ss:$8 sm:$0x3]
    %v875 = vadd.f32 %v863, %v867
    %v876 = vrot.slane %v875, 4
    %v877 = vadd.f32 %v875, %v876
    %v878 = vrot.slane %v877, 2
    %v879 = vadd.f32 %v877, %v878
    %v880 = vrot.slane %v879, 1
    %v881 = vadd.f32 %v879, %v880
    %v882 = vadd.f32 %v865, %v869
    %v883 = vrot.slane %v882, 4
    %v884 = vadd.f32 %v882, %v883
    %v885 = vrot.slane %v884, 2
    %v886 = vadd.f32 %v884, %v885
    %v887 = vrot.slane %v886, 1
    %v888 = vadd.f32 %v886, %v887
    %v889 = vmul.f32 %v881, %v228
    %v890 = vmul.f32 %v888, %v228
    %v891 = vsub.f32 %v863, %v889
    %v892 = vsub.f32 %v865, %v890
    %v893 = vsub.f32 %v867, %v889
    %v894 = vsub.f32 %v869, %v890
    %v895 = vmul.f32 %v891, %v891
    %v896 = vmul.f32 %v892, %v892
    %v897 = vmul.f32 %v893, %v893
    %v898 = vmul.f32 %v894, %v894
    %v899 = vadd.f32 %v895, %v897
    %v900 = vrot.slane %v899, 4
    %v901 = vadd.f32 %v899, %v900
    %v902 = vrot.slane %v901, 2
    %v903 = vadd.f32 %v901, %v902
    %v904 = vrot.slane %v903, 1
    %v905 = vadd.f32 %v903, %v904
    %v906 = vadd.f32 %v896, %v898
    %v907 = vrot.slane %v906, 4
    %v908 = vadd.f32 %v906, %v907
    %v909 = vrot.slane %v908, 2
    %v910 = vadd.f32 %v908, %v909
    %v911 = vrot.slane %v910, 1
    %v912 = vadd.f32 %v910, %v911
    %v913 = vmul.f32 %v905, %v228
    %v914 = vmul.f32 %v912, %v228
    %v915 = vadd.f32 %v913, 1e-05
    %v916 = vadd.f32 %v914, 1e-05
    %v917 = vrsqrt.pop %v915
    %v918 = vrsqrt.pop %v916
    %v921 = vcombine.low %v917, %v918
    %v923 = vunpack.c.l.s4 1966171168
    %v924 = vunpack.c.0.s8 %v923
    %v925 = vlaneseq
    %v926 = vshrl.u32 %v925, 7
    %v927 = vsub.s32 %v924, %v926
    %v928 = vrot.slane %v921, %v927
    %v930 = vunpack.c.l.s4 1966171168
    %v931 = vunpack.c.0.s8 %v930
    %v932 = vlaneseq
    %v933 = vshrl.u32 %v932, 7
    %v934 = vsub.s32 %v931, %v933
    %v935 = vrot.slane %v928, %v934
    %v937 = vmul.f32 %v872, %v935
    %v939 = vlaneseq
    %v940 = vshrl.u32 %v939, 7
    %v941 = vsub.s32 0, %v940
    %v942 = vrot.slane %v937, %v941
    %v943 = vlaneseq
    %v944 = vshrl.u32 %v943, 7
    %v945 = vsub.s32 1, %v944
    %v946 = vrot.slane %v937, %v945
    %v949 = vmul.f32 %v891, %v942
    %v950 = vmul.f32 %v892, %v946
    %v951 = vmul.f32 %v893, %v942
    %v952 = vmul.f32 %v894, %v946
    %v954 = vlaneseq
    %v955 = vshrl.u32 %v954, 7
    %v956 = vsub.s32 0, %v955
    %v957 = vrot.slane %v874, %v956
    %v958 = vlaneseq
    %v959 = vshrl.u32 %v958, 7
    %v960 = vsub.s32 1, %v959
    %v961 = vrot.slane %v874, %v960
    %v964 = vadd.f32 %v949, %v957
    %v965 = vadd.f32 %v950, %v961
    %v966 = vadd.f32 %v951, %v957
    %v967 = vadd.f32 %v952, %v961
    %v968 = vmax.f32 %v964, %v965
    %v969 = vmax.f32 %v966, %v967
    %v970 = vpack.c.bf16 %v969, %v968
    %v971 = vld [vmem:[#allocation7] sm:$0xff]
    %v972 = vld [vmem:[#allocation7 + $0x8] sm:$0xff]
    %v973 = vld [vmem:[#allocation7 + $0x10] sm:$0xff]
    %v974 = vld [vmem:[#allocation7 + $0x18] sm:$0xff]
    %v975 = vld [vmem:[#allocation7 + $0x20] sm:$0xff]
    %v976 = vld [vmem:[#allocation7 + $0x28] sm:$0xff]
    %v977 = vld [vmem:[#allocation7 + $0x30] sm:$0xff]
    %v978 = vld [vmem:[#allocation7 + $0x38] sm:$0xff]
    %v979 = vld [vmem:[#allocation7 + $0x40] sm:$0xff]
    %v980 = vld [vmem:[#allocation7 + $0x48] sm:$0xff]
    %v981 = vld [vmem:[#allocation7 + $0x50] sm:$0xff]
    %v982 = vld [vmem:[#allocation7 + $0x58] sm:$0xff]
    %v983 = vld [vmem:[#allocation7 + $0x60] sm:$0xff]
    %v984 = vld [vmem:[#allocation7 + $0x68] sm:$0xff]
    %v985 = vld [vmem:[#allocation7 + $0x70] sm:$0xff]
    %v986 = vld [vmem:[#allocation7 + $0x78] sm:$0xff]
    %v987 = vld [vmem:[#allocation7 + $0x80] sm:$0xff]
    %v988 = vld [vmem:[#allocation7 + $0x88] sm:$0xff]
    %v989 = vld [vmem:[#allocation7 + $0x90] sm:$0xff]
    %v990 = vld [vmem:[#allocation7 + $0x98] sm:$0xff]
    %v991 = vld [vmem:[#allocation7 + $0xa0] sm:$0xff]
    %v992 = vld [vmem:[#allocation7 + $0xa8] sm:$0xff]
    %v993 = vld [vmem:[#allocation7 + $0xb0] sm:$0xff]
    %v994 = vld [vmem:[#allocation7 + $0xb8] sm:$0xff]
    %v995 = vld [vmem:[#allocation7 + $0xc0] sm:$0xff]
    %v996 = vld [vmem:[#allocation7 + $0xc8] sm:$0xff]
    %v997 = vld [vmem:[#allocation7 + $0xd0] sm:$0xff]
    %v998 = vld [vmem:[#allocation7 + $0xd8] sm:$0xff]
    %v999 = vld [vmem:[#allocation7 + $0xe0] sm:$0xff]
    %v1000 = vld [vmem:[#allocation7 + $0xe8] sm:$0xff]
    %v1001 = vld [vmem:[#allocation7 + $0xf0] sm:$0xff]
    %v1002 = vld [vmem:[#allocation7 + $0xf8] sm:$0xff]
    %v1019 = vunpack.c.l.b16 %v987
    %v1020 = vunpack.c.h.b16 %v987
    %v1021 = vunpack.c.l.b16 %v988
    %v1022 = vunpack.c.h.b16 %v988
    %v1023 = vunpack.c.l.b16 %v989
    %v1024 = vunpack.c.h.b16 %v989
    %v1025 = vunpack.c.l.b16 %v990
    %v1026 = vunpack.c.h.b16 %v990
    %v1027 = vunpack.c.l.b16 %v991
    %v1028 = vunpack.c.h.b16 %v991
    %v1029 = vunpack.c.l.b16 %v992
    %v1030 = vunpack.c.h.b16 %v992
    %v1031 = vunpack.c.l.b16 %v993
    %v1032 = vunpack.c.h.b16 %v993
    %v1033 = vunpack.c.l.b16 %v994
    %v1034 = vunpack.c.h.b16 %v994
    %v1035 = vunpack.c.l.b16 %v995
    %v1036 = vunpack.c.h.b16 %v995
    %v1037 = vunpack.c.l.b16 %v996
    %v1038 = vunpack.c.h.b16 %v996
    %v1039 = vunpack.c.l.b16 %v997
    %v1040 = vunpack.c.h.b16 %v997
    %v1041 = vunpack.c.l.b16 %v998
    %v1042 = vunpack.c.h.b16 %v998
    %v1043 = vunpack.c.l.b16 %v999
    %v1044 = vunpack.c.h.b16 %v999
    %v1045 = vunpack.c.l.b16 %v1000
    %v1046 = vunpack.c.h.b16 %v1000
    %v1047 = vunpack.c.l.b16 %v1001
    %v1048 = vunpack.c.h.b16 %v1001
    %v1049 = vunpack.c.l.b16 %v1002
    %v1050 = vunpack.c.h.b16 %v1002
    %v1051 = vpack.c.b16 %v1021, %v1019
    %v1052 = vpack.c.b16 %v1022, %v1020
    %v1053 = vpack.c.b16 %v1025, %v1023
    %v1054 = vpack.c.b16 %v1026, %v1024
    %v1055 = vpack.c.b16 %v1029, %v1027
    %v1056 = vpack.c.b16 %v1030, %v1028
    %v1057 = vpack.c.b16 %v1033, %v1031
    %v1058 = vpack.c.b16 %v1034, %v1032
    %v1059 = vpack.c.b16 %v1037, %v1035
    %v1060 = vpack.c.b16 %v1038, %v1036
    %v1061 = vpack.c.b16 %v1041, %v1039
    %v1062 = vpack.c.b16 %v1042, %v1040
    %v1063 = vpack.c.b16 %v1045, %v1043
    %v1064 = vpack.c.b16 %v1046, %v1044
    %v1065 = vpack.c.b16 %v1049, %v1047
    %v1066 = vpack.c.b16 %v1050, %v1048
    %1083 = vmatprep.subr.bf16.mxu0 %v1052
    %1084 = vmatpush1.bf16.msra.mxu0 %v1051
    %1085 = vmatprep.subr.bf16.mxu0 %v1054
    %1086 = vmatpush1.bf16.msra.mxu0 %v1053
    %1087 = vmatprep.subr.bf16.mxu0 %v1056
    %1088 = vmatpush1.bf16.msra.mxu0 %v1055
    %1089 = vmatprep.subr.bf16.mxu0 %v1058
    %1090 = vmatpush1.bf16.msra.mxu0 %v1057
    %1091 = vmatprep.subr.bf16.mxu0 %v1060
    %1092 = vmatpush1.bf16.msra.mxu0 %v1059
    %1093 = vmatprep.subr.bf16.mxu0 %v1062
    %1094 = vmatpush1.bf16.msra.mxu0 %v1061
    %1095 = vmatprep.subr.bf16.mxu0 %v1064
    %1096 = vmatpush1.bf16.msra.mxu0 %v1063
    %1097 = vmatprep.subr.bf16.mxu0 %v1066
    %1098 = vmatpush1.bf16.msra.mxu0 %v1065
    %1099 = vmatprep.subr.bf16.mxu0 0
    %1100 = vmatpush1.bf16.msra.mxu0 0
    %1101 = vmatprep.subr.bf16.mxu0 0
    %1102 = vmatpush1.bf16.msra.mxu0 0
    %1103 = vmatprep.subr.bf16.mxu0 0
    %1104 = vmatpush1.bf16.msra.mxu0 0
    %1105 = vmatprep.subr.bf16.mxu0 0
    %1106 = vmatpush1.bf16.msra.mxu0 0
    %1107 = vmatprep.subr.bf16.mxu0 0
    %1108 = vmatpush1.bf16.msra.mxu0 0
    %1109 = vmatprep.subr.bf16.mxu0 0
    %1110 = vmatpush1.bf16.msra.mxu0 0
    %1111 = vmatprep.subr.bf16.mxu0 0
    %1112 = vmatpush1.bf16.msra.mxu0 0
    %1113 = vmatprep.subr.bf16.mxu0 0
    %1114 = vmatpush1.bf16.msra.mxu0 0
    %1115 = vmatprep.mubr.bf16.mxu0 0
    %1116 = vmatmul.mubr.bf16.gmra.mrb[0].mxu0 %v730
    %v1117 = vpop.f32.mrb[0].mxu0
    %v1118 = vadd.f32 0.0, %v1117
    %v1119 = vpop.f32.mrb[0].mxu0
    %v1120 = vadd.f32 0.0, %v1119
    %v1121 = vpop.f32.mrb[0].mxu0
    %v1122 = vadd.f32 0.0, %v1121
    %v1123 = vpop.f32.mrb[0].mxu0
    %v1124 = vadd.f32 0.0, %v1123
    %1125 = vdwg.mxu0
    %v1142 = vunpack.c.l.b16 %v971
    %v1143 = vunpack.c.h.b16 %v971
    %v1144 = vunpack.c.l.b16 %v972
    %v1145 = vunpack.c.h.b16 %v972
    %v1146 = vunpack.c.l.b16 %v973
    %v1147 = vunpack.c.h.b16 %v973
    %v1148 = vunpack.c.l.b16 %v974
    %v1149 = vunpack.c.h.b16 %v974
    %v1150 = vunpack.c.l.b16 %v975
    %v1151 = vunpack.c.h.b16 %v975
    %v1152 = vunpack.c.l.b16 %v976
    %v1153 = vunpack.c.h.b16 %v976
    %v1154 = vunpack.c.l.b16 %v977
    %v1155 = vunpack.c.h.b16 %v977
    %v1156 = vunpack.c.l.b16 %v978
    %v1157 = vunpack.c.h.b16 %v978
    %v1158 = vunpack.c.l.b16 %v979
    %v1159 = vunpack.c.h.b16 %v979
    %v1160 = vunpack.c.l.b16 %v980
    %v1161 = vunpack.c.h.b16 %v980
    %v1162 = vunpack.c.l.b16 %v981
    %v1163 = vunpack.c.h.b16 %v981
    %v1164 = vunpack.c.l.b16 %v982
    %v1165 = vunpack.c.h.b16 %v982
    %v1166 = vunpack.c.l.b16 %v983
    %v1167 = vunpack.c.h.b16 %v983
    %v1168 = vunpack.c.l.b16 %v984
    %v1169 = vunpack.c.h.b16 %v984
    %v1170 = vunpack.c.l.b16 %v985
    %v1171 = vunpack.c.h.b16 %v985
    %v1172 = vunpack.c.l.b16 %v986
    %v1173 = vunpack.c.h.b16 %v986
    %v1174 = vpack.c.b16 %v1144, %v1142
    %v1175 = vpack.c.b16 %v1145, %v1143
    %v1176 = vpack.c.b16 %v1148, %v1146
    %v1177 = vpack.c.b16 %v1149, %v1147
    %v1178 = vpack.c.b16 %v1152, %v1150
    %v1179 = vpack.c.b16 %v1153, %v1151
    %v1180 = vpack.c.b16 %v1156, %v1154
    %v1181 = vpack.c.b16 %v1157, %v1155
    %v1182 = vpack.c.b16 %v1160, %v1158
    %v1183 = vpack.c.b16 %v1161, %v1159
    %v1184 = vpack.c.b16 %v1164, %v1162
    %v1185 = vpack.c.b16 %v1165, %v1163
    %v1186 = vpack.c.b16 %v1168, %v1166
    %v1187 = vpack.c.b16 %v1169, %v1167
    %v1188 = vpack.c.b16 %v1172, %v1170
    %v1189 = vpack.c.b16 %v1173, %v1171
    %1206 = vmatprep.subr.bf16.mxu0 %v1175
    %1207 = vmatpush1.bf16.msra.mxu0 %v1174
    %1208 = vmatprep.subr.bf16.mxu0 %v1177
    %1209 = vmatpush1.bf16.msra.mxu0 %v1176
    %1210 = vmatprep.subr.bf16.mxu0 %v1179
    %1211 = vmatpush1.bf16.msra.mxu0 %v1178
    %1212 = vmatprep.subr.bf16.mxu0 %v1181
    %1213 = vmatpush1.bf16.msra.mxu0 %v1180
    %1214 = vmatprep.subr.bf16.mxu0 %v1183
    %1215 = vmatpush1.bf16.msra.mxu0 %v1182
    %1216 = vmatprep.subr.bf16.mxu0 %v1185
    %1217 = vmatpush1.bf16.msra.mxu0 %v1184
    %1218 = vmatprep.subr.bf16.mxu0 %v1187
    %1219 = vmatpush1.bf16.msra.mxu0 %v1186
    %1220 = vmatprep.subr.bf16.mxu0 %v1189
    %1221 = vmatpush1.bf16.msra.mxu0 %v1188
    %1222 = vmatprep.subr.bf16.mxu0 0
    %1223 = vmatpush1.bf16.msra.mxu0 0
    %1224 = vmatprep.subr.bf16.mxu0 0
    %1225 = vmatpush1.bf16.msra.mxu0 0
    %1226 = vmatprep.subr.bf16.mxu0 0
    %1227 = vmatpush1.bf16.msra.mxu0 0
    %1228 = vmatprep.subr.bf16.mxu0 0
    %1229 = vmatpush1.bf16.msra.mxu0 0
    %1230 = vmatprep.subr.bf16.mxu0 0
    %1231 = vmatpush1.bf16.msra.mxu0 0
    %1232 = vmatprep.subr.bf16.mxu0 0
    %1233 = vmatpush1.bf16.msra.mxu0 0
    %1234 = vmatprep.subr.bf16.mxu0 0
    %1235 = vmatpush1.bf16.msra.mxu0 0
    %1236 = vmatprep.subr.bf16.mxu0 0
    %1237 = vmatpush1.bf16.msra.mxu0 0
    %1238 = vmatprep.mubr.bf16.mxu0 0
    %1239 = vmatmul.mubr.bf16.gmra.mrb[0].mxu0 %v490
    %v1240 = vpop.f32.mrb[0].mxu0
    %v1241 = vadd.f32 %v1118, %v1240
    %v1242 = vpop.f32.mrb[0].mxu0
    %v1243 = vadd.f32 %v1120, %v1242
    %v1244 = vpop.f32.mrb[0].mxu0
    %v1245 = vadd.f32 %v1122, %v1244
    %v1246 = vpop.f32.mrb[0].mxu0
    %v1247 = vadd.f32 %v1124, %v1246
    %1248 = vdwg.mxu0
    %v1249 = vld [vmem:[#allocation7 + $0x100] sm:$0xff]
    %v1250 = vld [vmem:[#allocation7 + $0x108] sm:$0xff]
    %v1251 = vld [vmem:[#allocation7 + $0x110] sm:$0xff]
    %v1252 = vld [vmem:[#allocation7 + $0x118] sm:$0xff]
    %v1253 = vld [vmem:[#allocation7 + $0x120] sm:$0xff]
    %v1254 = vld [vmem:[#allocation7 + $0x128] sm:$0xff]
    %v1255 = vld [vmem:[#allocation7 + $0x130] sm:$0xff]
    %v1256 = vld [vmem:[#allocation7 + $0x138] sm:$0xff]
    %v1257 = vld [vmem:[#allocation7 + $0x140] sm:$0xff]
    %v1258 = vld [vmem:[#allocation7 + $0x148] sm:$0xff]
    %v1259 = vld [vmem:[#allocation7 + $0x150] sm:$0xff]
    %v1260 = vld [vmem:[#allocation7 + $0x158] sm:$0xff]
    %v1261 = vld [vmem:[#allocation7 + $0x160] sm:$0xff]
    %v1262 = vld [vmem:[#allocation7 + $0x168] sm:$0xff]
    %v1263 = vld [vmem:[#allocation7 + $0x170] sm:$0xff]
    %v1264 = vld [vmem:[#allocation7 + $0x178] sm:$0xff]
    %v1281 = vunpack.c.l.b16 %v1249
    %v1282 = vunpack.c.h.b16 %v1249
    %v1283 = vunpack.c.l.b16 %v1250
    %v1284 = vunpack.c.h.b16 %v1250
    %v1285 = vunpack.c.l.b16 %v1251
    %v1286 = vunpack.c.h.b16 %v1251
    %v1287 = vunpack.c.l.b16 %v1252
    %v1288 = vunpack.c.h.b16 %v1252
    %v1289 = vunpack.c.l.b16 %v1253
    %v1290 = vunpack.c.h.b16 %v1253
    %v1291 = vunpack.c.l.b16 %v1254
    %v1292 = vunpack.c.h.b16 %v1254
    %v1293 = vunpack.c.l.b16 %v1255
    %v1294 = vunpack.c.h.b16 %v1255
    %v1295 = vunpack.c.l.b16 %v1256
    %v1296 = vunpack.c.h.b16 %v1256
    %v1297 = vunpack.c.l.b16 %v1257
    %v1298 = vunpack.c.h.b16 %v1257
    %v1299 = vunpack.c.l.b16 %v1258
    %v1300 = vunpack.c.h.b16 %v1258
    %v1301 = vunpack.c.l.b16 %v1259
    %v1302 = vunpack.c.h.b16 %v1259
    %v1303 = vunpack.c.l.b16 %v1260
    %v1304 = vunpack.c.h.b16 %v1260
    %v1305 = vunpack.c.l.b16 %v1261
    %v1306 = vunpack.c.h.b16 %v1261
    %v1307 = vunpack.c.l.b16 %v1262
    %v1308 = vunpack.c.h.b16 %v1262
    %v1309 = vunpack.c.l.b16 %v1263
    %v1310 = vunpack.c.h.b16 %v1263
    %v1311 = vunpack.c.l.b16 %v1264
    %v1312 = vunpack.c.h.b16 %v1264
    %v1313 = vpack.c.b16 %v1283, %v1281
    %v1314 = vpack.c.b16 %v1284, %v1282
    %v1315 = vpack.c.b16 %v1287, %v1285
    %v1316 = vpack.c.b16 %v1288, %v1286
    %v1317 = vpack.c.b16 %v1291, %v1289
    %v1318 = vpack.c.b16 %v1292, %v1290
    %v1319 = vpack.c.b16 %v1295, %v1293
    %v1320 = vpack.c.b16 %v1296, %v1294
    %v1321 = vpack.c.b16 %v1299, %v1297
    %v1322 = vpack.c.b16 %v1300, %v1298
    %v1323 = vpack.c.b16 %v1303, %v1301
    %v1324 = vpack.c.b16 %v1304, %v1302
    %v1325 = vpack.c.b16 %v1307, %v1305
    %v1326 = vpack.c.b16 %v1308, %v1306
    %v1327 = vpack.c.b16 %v1311, %v1309
    %v1328 = vpack.c.b16 %v1312, %v1310
    %1345 = vmatprep.subr.bf16.mxu0 %v1314
    %1346 = vmatpush1.bf16.msra.mxu0 %v1313
    %1347 = vmatprep.subr.bf16.mxu0 %v1316
    %1348 = vmatpush1.bf16.msra.mxu0 %v1315
    %1349 = vmatprep.subr.bf16.mxu0 %v1318
    %1350 = vmatpush1.bf16.msra.mxu0 %v1317
    %1351 = vmatprep.subr.bf16.mxu0 %v1320
    %1352 = vmatpush1.bf16.msra.mxu0 %v1319
    %1353 = vmatprep.subr.bf16.mxu0 %v1322
    %1354 = vmatpush1.bf16.msra.mxu0 %v1321
    %1355 = vmatprep.subr.bf16.mxu0 %v1324
    %1356 = vmatpush1.bf16.msra.mxu0 %v1323
    %1357 = vmatprep.subr.bf16.mxu0 %v1326
    %1358 = vmatpush1.bf16.msra.mxu0 %v1325
    %1359 = vmatprep.subr.bf16.mxu0 %v1328
    %1360 = vmatpush1.bf16.msra.mxu0 %v1327
    %1361 = vmatprep.subr.bf16.mxu0 0
    %1362 = vmatpush1.bf16.msra.mxu0 0
    %1363 = vmatprep.subr.bf16.mxu0 0
    %1364 = vmatpush1.bf16.msra.mxu0 0
    %1365 = vmatprep.subr.bf16.mxu0 0
    %1366 = vmatpush1.bf16.msra.mxu0 0
    %1367 = vmatprep.subr.bf16.mxu0 0
    %1368 = vmatpush1.bf16.msra.mxu0 0
    %1369 = vmatprep.subr.bf16.mxu0 0
    %1370 = vmatpush1.bf16.msra.mxu0 0
    %1371 = vmatprep.subr.bf16.mxu0 0
    %1372 = vmatpush1.bf16.msra.mxu0 0
    %1373 = vmatprep.subr.bf16.mxu0 0
    %1374 = vmatpush1.bf16.msra.mxu0 0
    %1375 = vmatprep.subr.bf16.mxu0 0
    %1376 = vmatpush1.bf16.msra.mxu0 0
    %1377 = vmatprep.mubr.bf16.mxu0 0
    %1378 = vmatmul.mubr.bf16.gmra.mrb[0].mxu0 %v970
    %v1379 = vpop.f32.mrb[0].mxu0
    %v1380 = vadd.f32 0.0, %v1379
    %v1381 = vpop.f32.mrb[0].mxu0
    %v1382 = vadd.f32 0.0, %v1381
    %v1383 = vpop.f32.mrb[0].mxu0
    %v1384 = vadd.f32 0.0, %v1383
    %v1385 = vpop.f32.mrb[0].mxu0
    %v1386 = vadd.f32 0.0, %v1385
    %1387 = vdwg.mxu0
    %v1388 = vadd.f32 %v1241, %v1380
    %v1389 = vadd.f32 %v1243, %v1382
    %v1390 = vadd.f32 %v1245, %v1384
    %v1391 = vadd.f32 %v1247, %v1386
    %s1392 = scalar_lea.vmem [#allocation10], 16
    %v1393 = vld [vmem:[%s1392] ss:$8 sm:$0x3]
    %s1394 = scalar_lea.vmem [#allocation10], 17
    %v1395 = vld [vmem:[%s1394] ss:$8 sm:$0x3]
    %v1396 = vadd.f32 %v1388, %v1390
    %v1397 = vrot.slane %v1396, 4
    %v1398 = vadd.f32 %v1396, %v1397
    %v1399 = vrot.slane %v1398, 2
    %v1400 = vadd.f32 %v1398, %v1399
    %v1401 = vrot.slane %v1400, 1
    %v1402 = vadd.f32 %v1400, %v1401
    %v1403 = vadd.f32 %v1389, %v1391
    %v1404 = vrot.slane %v1403, 4
    %v1405 = vadd.f32 %v1403, %v1404
    %v1406 = vrot.slane %v1405, 2
    %v1407 = vadd.f32 %v1405, %v1406
    %v1408 = vrot.slane %v1407, 1
    %v1409 = vadd.f32 %v1407, %v1408
    %v1410 = vmul.f32 %v1402, %v228
    %v1411 = vmul.f32 %v1409, %v228
    %v1412 = vsub.f32 %v1388, %v1410
    %v1413 = vsub.f32 %v1389, %v1411
    %v1414 = vsub.f32 %v1390, %v1410
    %v1415 = vsub.f32 %v1391, %v1411
    %v1416 = vmul.f32 %v1412, %v1412
    %v1417 = vmul.f32 %v1413, %v1413
    %v1418 = vmul.f32 %v1414, %v1414
    %v1419 = vmul.f32 %v1415, %v1415
    %v1420 = vadd.f32 %v1416, %v1418
    %v1421 = vrot.slane %v1420, 4
    %v1422 = vadd.f32 %v1420, %v1421
    %v1423 = vrot.slane %v1422, 2
    %v1424 = vadd.f32 %v1422, %v1423
    %v1425 = vrot.slane %v1424, 1
    %v1426 = vadd.f32 %v1424, %v1425
    %v1427 = vadd.f32 %v1417, %v1419
    %v1428 = vrot.slane %v1427, 4
    %v1429 = vadd.f32 %v1427, %v1428
    %v1430 = vrot.slane %v1429, 2
    %v1431 = vadd.f32 %v1429, %v1430
    %v1432 = vrot.slane %v1431, 1
    %v1433 = vadd.f32 %v1431, %v1432
    %v1434 = vmul.f32 %v1426, %v228
    %v1435 = vmul.f32 %v1433, %v228
    %v1436 = vadd.f32 %v1434, 1e-05
    %v1437 = vadd.f32 %v1435, 1e-05
    %v1438 = vrsqrt.pop %v1436
    %v1439 = vrsqrt.pop %v1437
    %v1442 = vcombine.low %v1438, %v1439
    %v1444 = vunpack.c.l.s4 1966171168
    %v1445 = vunpack.c.0.s8 %v1444
    %v1446 = vlaneseq
    %v1447 = vshrl.u32 %v1446, 7
    %v1448 = vsub.s32 %v1445, %v1447
    %v1449 = vrot.slane %v1442, %v1448
    %v1451 = vunpack.c.l.s4 1966171168
    %v1452 = vunpack.c.0.s8 %v1451
    %v1453 = vlaneseq
    %v1454 = vshrl.u32 %v1453, 7
    %v1455 = vsub.s32 %v1452, %v1454
    %v1456 = vrot.slane %v1449, %v1455
    %v1458 = vmul.f32 %v1393, %v1456
    %v1460 = vlaneseq
    %v1461 = vshrl.u32 %v1460, 7
    %v1462 = vsub.s32 0, %v1461
    %v1463 = vrot.slane %v1458, %v1462
    %v1464 = vlaneseq
    %v1465 = vshrl.u32 %v1464, 7
    %v1466 = vsub.s32 1, %v1465
    %v1467 = vrot.slane %v1458, %v1466
    %v1470 = vmul.f32 %v1412, %v1463
    %v1471 = vmul.f32 %v1413, %v1467
    %v1472 = vmul.f32 %v1414, %v1463
    %v1473 = vmul.f32 %v1415, %v1467
    %v1475 = vlaneseq
    %v1476 = vshrl.u32 %v1475, 7
    %v1477 = vsub.s32 0, %v1476
    %v1478 = vrot.slane %v1395, %v1477
    %v1479 = vlaneseq
    %v1480 = vshrl.u32 %v1479, 7
    %v1481 = vsub.s32 1, %v1480
    %v1482 = vrot.slane %v1395, %v1481
    %v1485 = vadd.f32 %v1470, %v1478
    %v1486 = vadd.f32 %v1471, %v1482
    %v1487 = vadd.f32 %v1472, %v1478
    %v1488 = vadd.f32 %v1473, %v1482
    %v1489 = vmax.f32 %v1485, %v1486
    %v1490 = vmax.f32 %v1487, %v1488
    %v1491 = vpack.c.bf16 %v1490, %v1489
    %s1492 = scalar_lea.vmem [#allocation7], 384
    %v1493 = vld [vmem:[%s1492] sm:$0xff]
    %v1494 = vld [vmem:[%s1492 + $0x8] sm:$0xff]
    %v1495 = vld [vmem:[%s1492 + $0x10] sm:$0xff]
    %v1496 = vld [vmem:[%s1492 + $0x18] sm:$0xff]
    %v1497 = vld [vmem:[%s1492 + $0x20] sm:$0xff]
    %v1498 = vld [vmem:[%s1492 + $0x28] sm:$0xff]
    %v1499 = vld [vmem:[%s1492 + $0x30] sm:$0xff]
    %v1500 = vld [vmem:[%s1492 + $0x38] sm:$0xff]
    %v1501 = vld [vmem:[%s1492 + $0x40] sm:$0xff]
    %v1502 = vld [vmem:[%s1492 + $0x48] sm:$0xff]
    %v1503 = vld [vmem:[%s1492 + $0x50] sm:$0xff]
    %v1504 = vld [vmem:[%s1492 + $0x58] sm:$0xff]
    %v1505 = vld [vmem:[%s1492 + $0x60] sm:$0xff]
    %v1506 = vld [vmem:[%s1492 + $0x68] sm:$0xff]
    %v1507 = vld [vmem:[%s1492 + $0x70] sm:$0xff]
    %v1508 = vld [vmem:[%s1492 + $0x78] sm:$0xff]
    %v1509 = vld [vmem:[%s1492 + $0x80] sm:$0xff]
    %v1510 = vld [vmem:[%s1492 + $0x88] sm:$0xff]
    %v1511 = vld [vmem:[%s1492 + $0x90] sm:$0xff]
    %v1512 = vld [vmem:[%s1492 + $0x98] sm:$0xff]
    %v1513 = vld [vmem:[%s1492 + $0xa0] sm:$0xff]
    %v1514 = vld [vmem:[%s1492 + $0xa8] sm:$0xff]
    %v1515 = vld [vmem:[%s1492 + $0xb0] sm:$0xff]
    %v1516 = vld [vmem:[%s1492 + $0xb8] sm:$0xff]
    %v1517 = vld [vmem:[%s1492 + $0xc0] sm:$0xff]
    %v1518 = vld [vmem:[%s1492 + $0xc8] sm:$0xff]
    %v1519 = vld [vmem:[%s1492 + $0xd0] sm:$0xff]
    %v1520 = vld [vmem:[%s1492 + $0xd8] sm:$0xff]
    %v1521 = vld [vmem:[%s1492 + $0xe0] sm:$0xff]
    %v1522 = vld [vmem:[%s1492 + $0xe8] sm:$0xff]
    %v1523 = vld [vmem:[%s1492 + $0xf0] sm:$0xff]
    %v1524 = vld [vmem:[%s1492 + $0xf8] sm:$0xff]
    %v1541 = vunpack.c.l.b16 %v1509
    %v1542 = vunpack.c.h.b16 %v1509
    %v1543 = vunpack.c.l.b16 %v1510
    %v1544 = vunpack.c.h.b16 %v1510
    %v1545 = vunpack.c.l.b16 %v1511
    %v1546 = vunpack.c.h.b16 %v1511
    %v1547 = vunpack.c.l.b16 %v1512
    %v1548 = vunpack.c.h.b16 %v1512
    %v1549 = vunpack.c.l.b16 %v1513
    %v1550 = vunpack.c.h.b16 %v1513
    %v1551 = vunpack.c.l.b16 %v1514
    %v1552 = vunpack.c.h.b16 %v1514
    %v1553 = vunpack.c.l.b16 %v1515
    %v1554 = vunpack.c.h.b16 %v1515
    %v1555 = vunpack.c.l.b16 %v1516
    %v1556 = vunpack.c.h.b16 %v1516
    %v1557 = vunpack.c.l.b16 %v1517
    %v1558 = vunpack.c.h.b16 %v1517
    %v1559 = vunpack.c.l.b16 %v1518
    %v1560 = vunpack.c.h.b16 %v1518
    %v1561 = vunpack.c.l.b16 %v1519
    %v1562 = vunpack.c.h.b16 %v1519
    %v1563 = vunpack.c.l.b16 %v1520
    %v1564 = vunpack.c.h.b16 %v1520
    %v1565 = vunpack.c.l.b16 %v1521
    %v1566 = vunpack.c.h.b16 %v1521
    %v1567 = vunpack.c.l.b16 %v1522
    %v1568 = vunpack.c.h.b16 %v1522
    %v1569 = vunpack.c.l.b16 %v1523
    %v1570 = vunpack.c.h.b16 %v1523
    %v1571 = vunpack.c.l.b16 %v1524
    %v1572 = vunpack.c.h.b16 %v1524
    %v1573 = vpack.c.b16 %v1543, %v1541
    %v1574 = vpack.c.b16 %v1544, %v1542
    %v1575 = vpack.c.b16 %v1547, %v1545
    %v1576 = vpack.c.b16 %v1548, %v1546
    %v1577 = vpack.c.b16 %v1551, %v1549
    %v1578 = vpack.c.b16 %v1552, %v1550
    %v1579 = vpack.c.b16 %v1555, %v1553
    %v1580 = vpack.c.b16 %v1556, %v1554
    %v1581 = vpack.c.b16 %v1559, %v1557
    %v1582 = vpack.c.b16 %v1560, %v1558
    %v1583 = vpack.c.b16 %v1563, %v1561
    %v1584 = vpack.c.b16 %v1564, %v1562
    %v1585 = vpack.c.b16 %v1567, %v1565
    %v1586 = vpack.c.b16 %v1568, %v1566
    %v1587 = vpack.c.b16 %v1571, %v1569
    %v1588 = vpack.c.b16 %v1572, %v1570
    %1605 = vmatprep.subr.bf16.mxu0 %v1574
    %1606 = vmatpush1.bf16.msra.mxu0 %v1573
    %1607 = vmatprep.subr.bf16.mxu0 %v1576
    %1608 = vmatpush1.bf16.msra.mxu0 %v1575
    %1609 = vmatprep.subr.bf16.mxu0 %v1578
    %1610 = vmatpush1.bf16.msra.mxu0 %v1577
    %1611 = vmatprep.subr.bf16.mxu0 %v1580
    %1612 = vmatpush1.bf16.msra.mxu0 %v1579
    %1613 = vmatprep.subr.bf16.mxu0 %v1582
    %1614 = vmatpush1.bf16.msra.mxu0 %v1581
    %1615 = vmatprep.subr.bf16.mxu0 %v1584
    %1616 = vmatpush1.bf16.msra.mxu0 %v1583
    %1617 = vmatprep.subr.bf16.mxu0 %v1586
    %1618 = vmatpush1.bf16.msra.mxu0 %v1585
    %1619 = vmatprep.subr.bf16.mxu0 %v1588
    %1620 = vmatpush1.bf16.msra.mxu0 %v1587
    %1621 = vmatprep.subr.bf16.mxu0 0
    %1622 = vmatpush1.bf16.msra.mxu0 0
    %1623 = vmatprep.subr.bf16.mxu0 0
    %1624 = vmatpush1.bf16.msra.mxu0 0
    %1625 = vmatprep.subr.bf16.mxu0 0
    %1626 = vmatpush1.bf16.msra.mxu0 0
    %1627 = vmatprep.subr.bf16.mxu0 0
    %1628 = vmatpush1.bf16.msra.mxu0 0
    %1629 = vmatprep.subr.bf16.mxu0 0
    %1630 = vmatpush1.bf16.msra.mxu0 0
    %1631 = vmatprep.subr.bf16.mxu0 0
    %1632 = vmatpush1.bf16.msra.mxu0 0
    %1633 = vmatprep.subr.bf16.mxu0 0
    %1634 = vmatpush1.bf16.msra.mxu0 0
    %1635 = vmatprep.subr.bf16.mxu0 0
    %1636 = vmatpush1.bf16.msra.mxu0 0
    %1637 = vmatprep.mubr.bf16.mxu0 0
    %1638 = vmatmul.mubr.bf16.gmra.mrb[0].mxu0 %v730
    %v1639 = vpop.f32.mrb[0].mxu0
    %v1640 = vadd.f32 0.0, %v1639
    %v1641 = vpop.f32.mrb[0].mxu0
    %v1642 = vadd.f32 0.0, %v1641
    %v1643 = vpop.f32.mrb[0].mxu0
    %v1644 = vadd.f32 0.0, %v1643
    %v1645 = vpop.f32.mrb[0].mxu0
    %v1646 = vadd.f32 0.0, %v1645
    %1647 = vdwg.mxu0
    %v1664 = vunpack.c.l.b16 %v1493
    %v1665 = vunpack.c.h.b16 %v1493
    %v1666 = vunpack.c.l.b16 %v1494
    %v1667 = vunpack.c.h.b16 %v1494
    %v1668 = vunpack.c.l.b16 %v1495
    %v1669 = vunpack.c.h.b16 %v1495
    %v1670 = vunpack.c.l.b16 %v1496
    %v1671 = vunpack.c.h.b16 %v1496
    %v1672 = vunpack.c.l.b16 %v1497
    %v1673 = vunpack.c.h.b16 %v1497
    %v1674 = vunpack.c.l.b16 %v1498
    %v1675 = vunpack.c.h.b16 %v1498
    %v1676 = vunpack.c.l.b16 %v1499
    %v1677 = vunpack.c.h.b16 %v1499
    %v1678 = vunpack.c.l.b16 %v1500
    %v1679 = vunpack.c.h.b16 %v1500
    %v1680 = vunpack.c.l.b16 %v1501
    %v1681 = vunpack.c.h.b16 %v1501
    %v1682 = vunpack.c.l.b16 %v1502
    %v1683 = vunpack.c.h.b16 %v1502
    %v1684 = vunpack.c.l.b16 %v1503
    %v1685 = vunpack.c.h.b16 %v1503
    %v1686 = vunpack.c.l.b16 %v1504
    %v1687 = vunpack.c.h.b16 %v1504
    %v1688 = vunpack.c.l.b16 %v1505
    %v1689 = vunpack.c.h.b16 %v1505
    %v1690 = vunpack.c.l.b16 %v1506
    %v1691 = vunpack.c.h.b16 %v1506
    %v1692 = vunpack.c.l.b16 %v1507
    %v1693 = vunpack.c.h.b16 %v1507
    %v1694 = vunpack.c.l.b16 %v1508
    %v1695 = vunpack.c.h.b16 %v1508
    %v1696 = vpack.c.b16 %v1666, %v1664
    %v1697 = vpack.c.b16 %v1667, %v1665
    %v1698 = vpack.c.b16 %v1670, %v1668
    %v1699 = vpack.c.b16 %v1671, %v1669
    %v1700 = vpack.c.b16 %v1674, %v1672
    %v1701 = vpack.c.b16 %v1675, %v1673
    %v1702 = vpack.c.b16 %v1678, %v1676
    %v1703 = vpack.c.b16 %v1679, %v1677
    %v1704 = vpack.c.b16 %v1682, %v1680
    %v1705 = vpack.c.b16 %v1683, %v1681
    %v1706 = vpack.c.b16 %v1686, %v1684
    %v1707 = vpack.c.b16 %v1687, %v1685
    %v1708 = vpack.c.b16 %v1690, %v1688
    %v1709 = vpack.c.b16 %v1691, %v1689
    %v1710 = vpack.c.b16 %v1694, %v1692
    %v1711 = vpack.c.b16 %v1695, %v1693
    %1728 = vmatprep.subr.bf16.mxu0 %v1697
    %1729 = vmatpush1.bf16.msra.mxu0 %v1696
    %1730 = vmatprep.subr.bf16.mxu0 %v1699
    %1731 = vmatpush1.bf16.msra.mxu0 %v1698
    %1732 = vmatprep.subr.bf16.mxu0 %v1701
    %1733 = vmatpush1.bf16.msra.mxu0 %v1700
    %1734 = vmatprep.subr.bf16.mxu0 %v1703
    %1735 = vmatpush1.bf16.msra.mxu0 %v1702
    %1736 = vmatprep.subr.bf16.mxu0 %v1705
    %1737 = vmatpush1.bf16.msra.mxu0 %v1704
    %1738 = vmatprep.subr.bf16.mxu0 %v1707
    %1739 = vmatpush1.bf16.msra.mxu0 %v1706
    %1740 = vmatprep.subr.bf16.mxu0 %v1709
    %1741 = vmatpush1.bf16.msra.mxu0 %v1708
    %1742 = vmatprep.subr.bf16.mxu0 %v1711
    %1743 = vmatpush1.bf16.msra.mxu0 %v1710
    %1744 = vmatprep.subr.bf16.mxu0 0
    %1745 = vmatpush1.bf16.msra.mxu0 0
    %1746 = vmatprep.subr.bf16.mxu0 0
    %1747 = vmatpush1.bf16.msra.mxu0 0
    %1748 = vmatprep.subr.bf16.mxu0 0
    %1749 = vmatpush1.bf16.msra.mxu0 0
    %1750 = vmatprep.subr.bf16.mxu0 0
    %1751 = vmatpush1.bf16.msra.mxu0 0
    %1752 = vmatprep.subr.bf16.mxu0 0
    %1753 = vmatpush1.bf16.msra.mxu0 0
    %1754 = vmatprep.subr.bf16.mxu0 0
    %1755 = vmatpush1.bf16.msra.mxu0 0
    %1756 = vmatprep.subr.bf16.mxu0 0
    %1757 = vmatpush1.bf16.msra.mxu0 0
    %1758 = vmatprep.subr.bf16.mxu0 0
    %1759 = vmatpush1.bf16.msra.mxu0 0
    %1760 = vmatprep.mubr.bf16.mxu0 0
    %1761 = vmatmul.mubr.bf16.gmra.mrb[0].mxu0 %v490
    %v1762 = vpop.f32.mrb[0].mxu0
    %v1763 = vadd.f32 %v1640, %v1762
    %v1764 = vpop.f32.mrb[0].mxu0
    %v1765 = vadd.f32 %v1642, %v1764
    %v1766 = vpop.f32.mrb[0].mxu0
    %v1767 = vadd.f32 %v1644, %v1766
    %v1768 = vpop.f32.mrb[0].mxu0
    %v1769 = vadd.f32 %v1646, %v1768
    %1770 = vdwg.mxu0
    %v1771 = vld [vmem:[%s1492 + $0x100] sm:$0xff]
    %v1772 = vld [vmem:[%s1492 + $0x108] sm:$0xff]
    %v1773 = vld [vmem:[%s1492 + $0x110] sm:$0xff]
    %v1774 = vld [vmem:[%s1492 + $0x118] sm:$0xff]
    %v1775 = vld [vmem:[%s1492 + $0x120] sm:$0xff]
    %v1776 = vld [vmem:[%s1492 + $0x128] sm:$0xff]
    %v1777 = vld [vmem:[%s1492 + $0x130] sm:$0xff]
    %v1778 = vld [vmem:[%s1492 + $0x138] sm:$0xff]
    %v1779 = vld [vmem:[%s1492 + $0x140] sm:$0xff]
    %v1780 = vld [vmem:[%s1492 + $0x148] sm:$0xff]
    %v1781 = vld [vmem:[%s1492 + $0x150] sm:$0xff]
    %v1782 = vld [vmem:[%s1492 + $0x158] sm:$0xff]
    %v1783 = vld [vmem:[%s1492 + $0x160] sm:$0xff]
    %v1784 = vld [vmem:[%s1492 + $0x168] sm:$0xff]
    %v1785 = vld [vmem:[%s1492 + $0x170] sm:$0xff]
    %v1786 = vld [vmem:[%s1492 + $0x178] sm:$0xff]
    %v1803 = vunpack.c.l.b16 %v1771
    %v1804 = vunpack.c.h.b16 %v1771
    %v1805 = vunpack.c.l.b16 %v1772
    %v1806 = vunpack.c.h.b16 %v1772
    %v1807 = vunpack.c.l.b16 %v1773
    %v1808 = vunpack.c.h.b16 %v1773
    %v1809 = vunpack.c.l.b16 %v1774
    %v1810 = vunpack.c.h.b16 %v1774
    %v1811 = vunpack.c.l.b16 %v1775
    %v1812 = vunpack.c.h.b16 %v1775
    %v1813 = vunpack.c.l.b16 %v1776
    %v1814 = vunpack.c.h.b16 %v1776
    %v1815 = vunpack.c.l.b16 %v1777
    %v1816 = vunpack.c.h.b16 %v1777
    %v1817 = vunpack.c.l.b16 %v1778
    %v1818 = vunpack.c.h.b16 %v1778
    %v1819 = vunpack.c.l.b16 %v1779
    %v1820 = vunpack.c.h.b16 %v1779
    %v1821 = vunpack.c.l.b16 %v1780
    %v1822 = vunpack.c.h.b16 %v1780
    %v1823 = vunpack.c.l.b16 %v1781
    %v1824 = vunpack.c.h.b16 %v1781
    %v1825 = vunpack.c.l.b16 %v1782
    %v1826 = vunpack.c.h.b16 %v1782
    %v1827 = vunpack.c.l.b16 %v1783
    %v1828 = vunpack.c.h.b16 %v1783
    %v1829 = vunpack.c.l.b16 %v1784
    %v1830 = vunpack.c.h.b16 %v1784
    %v1831 = vunpack.c.l.b16 %v1785
    %v1832 = vunpack.c.h.b16 %v1785
    %v1833 = vunpack.c.l.b16 %v1786
    %v1834 = vunpack.c.h.b16 %v1786
    %v1835 = vpack.c.b16 %v1805, %v1803
    %v1836 = vpack.c.b16 %v1806, %v1804
    %v1837 = vpack.c.b16 %v1809, %v1807
    %v1838 = vpack.c.b16 %v1810, %v1808
    %v1839 = vpack.c.b16 %v1813, %v1811
    %v1840 = vpack.c.b16 %v1814, %v1812
    %v1841 = vpack.c.b16 %v1817, %v1815
    %v1842 = vpack.c.b16 %v1818, %v1816
    %v1843 = vpack.c.b16 %v1821, %v1819
    %v1844 = vpack.c.b16 %v1822, %v1820
    %v1845 = vpack.c.b16 %v1825, %v1823
    %v1846 = vpack.c.b16 %v1826, %v1824
    %v1847 = vpack.c.b16 %v1829, %v1827
    %v1848 = vpack.c.b16 %v1830, %v1828
    %v1849 = vpack.c.b16 %v1833, %v1831
    %v1850 = vpack.c.b16 %v1834, %v1832
    %1867 = vmatprep.subr.bf16.mxu0 %v1836
    %1868 = vmatpush1.bf16.msra.mxu0 %v1835
    %1869 = vmatprep.subr.bf16.mxu0 %v1838
    %1870 = vmatpush1.bf16.msra.mxu0 %v1837
    %1871 = vmatprep.subr.bf16.mxu0 %v1840
    %1872 = vmatpush1.bf16.msra.mxu0 %v1839
    %1873 = vmatprep.subr.bf16.mxu0 %v1842
    %1874 = vmatpush1.bf16.msra.mxu0 %v1841
    %1875 = vmatprep.subr.bf16.mxu0 %v1844
    %1876 = vmatpush1.bf16.msra.mxu0 %v1843
    %1877 = vmatprep.subr.bf16.mxu0 %v1846
    %1878 = vmatpush1.bf16.msra.mxu0 %v1845
    %1879 = vmatprep.subr.bf16.mxu0 %v1848
    %1880 = vmatpush1.bf16.msra.mxu0 %v1847
    %1881 = vmatprep.subr.bf16.mxu0 %v1850
    %1882 = vmatpush1.bf16.msra.mxu0 %v1849
    %1883 = vmatprep.subr.bf16.mxu0 0
    %1884 = vmatpush1.bf16.msra.mxu0 0
    %1885 = vmatprep.subr.bf16.mxu0 0
    %1886 = vmatpush1.bf16.msra.mxu0 0
    %1887 = vmatprep.subr.bf16.mxu0 0
    %1888 = vmatpush1.bf16.msra.mxu0 0
    %1889 = vmatprep.subr.bf16.mxu0 0
    %1890 = vmatpush1.bf16.msra.mxu0 0
    %1891 = vmatprep.subr.bf16.mxu0 0
    %1892 = vmatpush1.bf16.msra.mxu0 0
    %1893 = vmatprep.subr.bf16.mxu0 0
    %1894 = vmatpush1.bf16.msra.mxu0 0
    %1895 = vmatprep.subr.bf16.mxu0 0
    %1896 = vmatpush1.bf16.msra.mxu0 0
    %1897 = vmatprep.subr.bf16.mxu0 0
    %1898 = vmatpush1.bf16.msra.mxu0 0
    %1899 = vmatprep.mubr.bf16.mxu0 0
    %1900 = vmatmul.mubr.bf16.gmra.mrb[0].mxu0 %v970
    %v1901 = vpop.f32.mrb[0].mxu0
    %v1902 = vadd.f32 0.0, %v1901
    %v1903 = vpop.f32.mrb[0].mxu0
    %v1904 = vadd.f32 0.0, %v1903
    %v1905 = vpop.f32.mrb[0].mxu0
    %v1906 = vadd.f32 0.0, %v1905
    %v1907 = vpop.f32.mrb[0].mxu0
    %v1908 = vadd.f32 0.0, %v1907
    %1909 = vdwg.mxu0
    %v1910 = vadd.f32 %v1763, %v1902
    %v1911 = vadd.f32 %v1765, %v1904
    %v1912 = vadd.f32 %v1767, %v1906
    %v1913 = vadd.f32 %v1769, %v1908
    %s1914 = scalar_lea.vmem [#allocation10], 18
    %v1915 = vld [vmem:[%s1914] ss:$8 sm:$0x3]
    %s1916 = scalar_lea.vmem [#allocation10], 19
    %v1917 = vld [vmem:[%s1916] ss:$8 sm:$0x3]
    %v1918 = vadd.f32 %v1910, %v1912
    %v1919 = vrot.slane %v1918, 4
    %v1920 = vadd.f32 %v1918, %v1919
    %v1921 = vrot.slane %v1920, 2
    %v1922 = vadd.f32 %v1920, %v1921
    %v1923 = vrot.slane %v1922, 1
    %v1924 = vadd.f32 %v1922, %v1923
    %v1925 = vadd.f32 %v1911, %v1913
    %v1926 = vrot.slane %v1925, 4
    %v1927 = vadd.f32 %v1925, %v1926
    %v1928 = vrot.slane %v1927, 2
    %v1929 = vadd.f32 %v1927, %v1928
    %v1930 = vrot.slane %v1929, 1
    %v1931 = vadd.f32 %v1929, %v1930
    %v1932 = vmul.f32 %v1924, %v228
    %v1933 = vmul.f32 %v1931, %v228
    %v1934 = vsub.f32 %v1910, %v1932
    %v1935 = vsub.f32 %v1911, %v1933
    %v1936 = vsub.f32 %v1912, %v1932
    %v1937 = vsub.f32 %v1913, %v1933
    %v1938 = vmul.f32 %v1934, %v1934
    %v1939 = vmul.f32 %v1935, %v1935
    %v1940 = vmul.f32 %v1936, %v1936
    %v1941 = vmul.f32 %v1937, %v1937
    %v1942 = vadd.f32 %v1938, %v1940
    %v1943 = vrot.slane %v1942, 4
    %v1944 = vadd.f32 %v1942, %v1943
    %v1945 = vrot.slane %v1944, 2
    %v1946 = vadd.f32 %v1944, %v1945
    %v1947 = vrot.slane %v1946, 1
    %v1948 = vadd.f32 %v1946, %v1947
    %v1949 = vadd.f32 %v1939, %v1941
    %v1950 = vrot.slane %v1949, 4
    %v1951 = vadd.f32 %v1949, %v1950
    %v1952 = vrot.slane %v1951, 2
    %v1953 = vadd.f32 %v1951, %v1952
    %v1954 = vrot.slane %v1953, 1
    %v1955 = vadd.f32 %v1953, %v1954
    %v1956 = vmul.f32 %v1948, %v228
    %v1957 = vmul.f32 %v1955, %v228
    %v1958 = vadd.f32 %v1956, 1e-05
    %v1959 = vadd.f32 %v1957, 1e-05
    %v1960 = vrsqrt.pop %v1958
    %v1961 = vrsqrt.pop %v1959
    %v1964 = vcombine.low %v1960, %v1961
    %v1966 = vunpack.c.l.s4 1966171168
    %v1967 = vunpack.c.0.s8 %v1966
    %v1968 = vlaneseq
    %v1969 = vshrl.u32 %v1968, 7
    %v1970 = vsub.s32 %v1967, %v1969
    %v1971 = vrot.slane %v1964, %v1970
    %v1973 = vunpack.c.l.s4 1966171168
    %v1974 = vunpack.c.0.s8 %v1973
    %v1975 = vlaneseq
    %v1976 = vshrl.u32 %v1975, 7
    %v1977 = vsub.s32 %v1974, %v1976
    %v1978 = vrot.slane %v1971, %v1977
    %v1980 = vmul.f32 %v1915, %v1978
    %v1982 = vlaneseq
    %v1983 = vshrl.u32 %v1982, 7
    %v1984 = vsub.s32 0, %v1983
    %v1985 = vrot.slane %v1980, %v1984
    %v1986 = vlaneseq
    %v1987 = vshrl.u32 %v1986, 7
    %v1988 = vsub.s32 1, %v1987
    %v1989 = vrot.slane %v1980, %v1988
    %v1992 = vmul.f32 %v1934, %v1985
    %v1993 = vmul.f32 %v1935, %v1989
    %v1994 = vmul.f32 %v1936, %v1985
    %v1995 = vmul.f32 %v1937, %v1989
    %v1997 = vlaneseq
    %v1998 = vshrl.u32 %v1997, 7
    %v1999 = vsub.s32 0, %v1998
    %v2000 = vrot.slane %v1917, %v1999
    %v2001 = vlaneseq
    %v2002 = vshrl.u32 %v2001, 7
    %v2003 = vsub.s32 1, %v2002
    %v2004 = vrot.slane %v1917, %v2003
    %v2007 = vadd.f32 %v1992, %v2000
    %v2008 = vadd.f32 %v1993, %v2004
    %v2009 = vadd.f32 %v1994, %v2000
    %v2010 = vadd.f32 %v1995, %v2004
    %v2011 = vmax.f32 %v2007, %v2008
    %v2012 = vmax.f32 %v2009, %v2010
    %v2013 = vpack.c.bf16 %v2012, %v2011
    %s2014 = scalar_lea.vmem [#allocation7], 768
    %v2015 = vld [vmem:[%s2014] sm:$0xff]
    %v2016 = vld [vmem:[%s2014 + $0x8] sm:$0xff]
    %v2017 = vld [vmem:[%s2014 + $0x10] sm:$0xff]
    %v2018 = vld [vmem:[%s2014 + $0x18] sm:$0xff]
    %v2019 = vld [vmem:[%s2014 + $0x20] sm:$0xff]
    %v2020 = vld [vmem:[%s2014 + $0x28] sm:$0xff]
    %v2021 = vld [vmem:[%s2014 + $0x30] sm:$0xff]
    %v2022 = vld [vmem:[%s2014 + $0x38] sm:$0xff]
    %v2023 = vld [vmem:[%s2014 + $0x40] sm:$0xff]
    %v2024 = vld [vmem:[%s2014 + $0x48] sm:$0xff]
    %v2025 = vld [vmem:[%s2014 + $0x50] sm:$0xff]
    %v2026 = vld [vmem:[%s2014 + $0x58] sm:$0xff]
    %v2027 = vld [vmem:[%s2014 + $0x60] sm:$0xff]
    %v2028 = vld [vmem:[%s2014 + $0x68] sm:$0xff]
    %v2029 = vld [vmem:[%s2014 + $0x70] sm:$0xff]
    %v2030 = vld [vmem:[%s2014 + $0x78] sm:$0xff]
    %v2031 = vld [vmem:[%s2014 + $0x80] sm:$0xff]
    %v2032 = vld [vmem:[%s2014 + $0x88] sm:$0xff]
    %v2033 = vld [vmem:[%s2014 + $0x90] sm:$0xff]
    %v2034 = vld [vmem:[%s2014 + $0x98] sm:$0xff]
    %v2035 = vld [vmem:[%s2014 + $0xa0] sm:$0xff]
    %v2036 = vld [vmem:[%s2014 + $0xa8] sm:$0xff]
    %v2037 = vld [vmem:[%s2014 + $0xb0] sm:$0xff]
    %v2038 = vld [vmem:[%s2014 + $0xb8] sm:$0xff]
    %v2039 = vld [vmem:[%s2014 + $0xc0] sm:$0xff]
    %v2040 = vld [vmem:[%s2014 + $0xc8] sm:$0xff]
    %v2041 = vld [vmem:[%s2014 + $0xd0] sm:$0xff]
    %v2042 = vld [vmem:[%s2014 + $0xd8] sm:$0xff]
    %v2043 = vld [vmem:[%s2014 + $0xe0] sm:$0xff]
    %v2044 = vld [vmem:[%s2014 + $0xe8] sm:$0xff]
    %v2045 = vld [vmem:[%s2014 + $0xf0] sm:$0xff]
    %v2046 = vld [vmem:[%s2014 + $0xf8] sm:$0xff]
    %v2063 = vunpack.c.l.b16 %v2031
    %v2064 = vunpack.c.h.b16 %v2031
    %v2065 = vunpack.c.l.b16 %v2032
    %v2066 = vunpack.c.h.b16 %v2032
    %v2067 = vunpack.c.l.b16 %v2033
    %v2068 = vunpack.c.h.b16 %v2033
    %v2069 = vunpack.c.l.b16 %v2034
    %v2070 = vunpack.c.h.b16 %v2034
    %v2071 = vunpack.c.l.b16 %v2035
    %v2072 = vunpack.c.h.b16 %v2035
    %v2073 = vunpack.c.l.b16 %v2036
    %v2074 = vunpack.c.h.b16 %v2036
    %v2075 = vunpack.c.l.b16 %v2037
    %v2076 = vunpack.c.h.b16 %v2037
    %v2077 = vunpack.c.l.b16 %v2038
    %v2078 = vunpack.c.h.b16 %v2038
    %v2079 = vunpack.c.l.b16 %v2039
    %v2080 = vunpack.c.h.b16 %v2039
    %v2081 = vunpack.c.l.b16 %v2040
    %v2082 = vunpack.c.h.b16 %v2040
    %v2083 = vunpack.c.l.b16 %v2041
    %v2084 = vunpack.c.h.b16 %v2041
    %v2085 = vunpack.c.l.b16 %v2042
    %v2086 = vunpack.c.h.b16 %v2042
    %v2087 = vunpack.c.l.b16 %v2043
    %v2088 = vunpack.c.h.b16 %v2043
    %v2089 = vunpack.c.l.b16 %v2044
    %v2090 = vunpack.c.h.b16 %v2044
    %v2091 = vunpack.c.l.b16 %v2045
    %v2092 = vunpack.c.h.b16 %v2045
    %v2093 = vunpack.c.l.b16 %v2046
    %v2094 = vunpack.c.h.b16 %v2046
    %v2095 = vpack.c.b16 %v2065, %v2063
    %v2096 = vpack.c.b16 %v2066, %v2064
    %v2097 = vpack.c.b16 %v2069, %v2067
    %v2098 = vpack.c.b16 %v2070, %v2068
    %v2099 = vpack.c.b16 %v2073, %v2071
    %v2100 = vpack.c.b16 %v2074, %v2072
    %v2101 = vpack.c.b16 %v2077, %v2075
    %v2102 = vpack.c.b16 %v2078, %v2076
    %v2103 = vpack.c.b16 %v2081, %v2079
    %v2104 = vpack.c.b16 %v2082, %v2080
    %v2105 = vpack.c.b16 %v2085, %v2083
    %v2106 = vpack.c.b16 %v2086, %v2084
    %v2107 = vpack.c.b16 %v2089, %v2087
    %v2108 = vpack.c.b16 %v2090, %v2088
    %v2109 = vpack.c.b16 %v2093, %v2091
    %v2110 = vpack.c.b16 %v2094, %v2092
    %2127 = vmatprep.subr.bf16.mxu0 %v2096
    %2128 = vmatpush1.bf16.msra.mxu0 %v2095
    %2129 = vmatprep.subr.bf16.mxu0 %v2098
    %2130 = vmatpush1.bf16.msra.mxu0 %v2097
    %2131 = vmatprep.subr.bf16.mxu0 %v2100
    %2132 = vmatpush1.bf16.msra.mxu0 %v2099
    %2133 = vmatprep.subr.bf16.mxu0 %v2102
    %2134 = vmatpush1.bf16.msra.mxu0 %v2101
    %2135 = vmatprep.subr.bf16.mxu0 %v2104
    %2136 = vmatpush1.bf16.msra.mxu0 %v2103
    %2137 = vmatprep.subr.bf16.mxu0 %v2106
    %2138 = vmatpush1.bf16.msra.mxu0 %v2105
    %2139 = vmatprep.subr.bf16.mxu0 %v2108
    %2140 = vmatpush1.bf16.msra.mxu0 %v2107
    %2141 = vmatprep.subr.bf16.mxu0 %v2110
    %2142 = vmatpush1.bf16.msra.mxu0 %v2109
    %2143 = vmatprep.subr.bf16.mxu0 0
    %2144 = vmatpush1.bf16.msra.mxu0 0
    %2145 = vmatprep.subr.bf16.mxu0 0
    %2146 = vmatpush1.bf16.msra.mxu0 0
    %2147 = vmatprep.subr.bf16.mxu0 0
    %2148 = vmatpush1.bf16.msra.mxu0 0
    %2149 = vmatprep.subr.bf16.mxu0 0
    %2150 = vmatpush1.bf16.msra.mxu0 0
    %2151 = vmatprep.subr.bf16.mxu0 0
    %2152 = vmatpush1.bf16.msra.mxu0 0
    %2153 = vmatprep.subr.bf16.mxu0 0
    %2154 = vmatpush1.bf16.msra.mxu0 0
    %2155 = vmatprep.subr.bf16.mxu0 0
    %2156 = vmatpush1.bf16.msra.mxu0 0
    %2157 = vmatprep.subr.bf16.mxu0 0
    %2158 = vmatpush1.bf16.msra.mxu0 0
    %2159 = vmatprep.mubr.bf16.mxu0 0
    %2160 = vmatmul.mubr.bf16.gmra.mrb[0].mxu0 %v730
    %v2161 = vpop.f32.mrb[0].mxu0
    %v2162 = vadd.f32 0.0, %v2161
    %v2163 = vpop.f32.mrb[0].mxu0
    %v2164 = vadd.f32 0.0, %v2163
    %v2165 = vpop.f32.mrb[0].mxu0
    %v2166 = vadd.f32 0.0, %v2165
    %v2167 = vpop.f32.mrb[0].mxu0
    %v2168 = vadd.f32 0.0, %v2167
    %2169 = vdwg.mxu0
    %v2186 = vunpack.c.l.b16 %v2015
    %v2187 = vunpack.c.h.b16 %v2015
    %v2188 = vunpack.c.l.b16 %v2016
    %v2189 = vunpack.c.h.b16 %v2016
    %v2190 = vunpack.c.l.b16 %v2017
    %v2191 = vunpack.c.h.b16 %v2017
    %v2192 = vunpack.c.l.b16 %v2018
    %v2193 = vunpack.c.h.b16 %v2018
    %v2194 = vunpack.c.l.b16 %v2019
    %v2195 = vunpack.c.h.b16 %v2019
    %v2196 = vunpack.c.l.b16 %v2020
    %v2197 = vunpack.c.h.b16 %v2020
    %v2198 = vunpack.c.l.b16 %v2021
    %v2199 = vunpack.c.h.b16 %v2021
    %v2200 = vunpack.c.l.b16 %v2022
    %v2201 = vunpack.c.h.b16 %v2022
    %v2202 = vunpack.c.l.b16 %v2023
    %v2203 = vunpack.c.h.b16 %v2023
    %v2204 = vunpack.c.l.b16 %v2024
    %v2205 = vunpack.c.h.b16 %v2024
    %v2206 = vunpack.c.l.b16 %v2025
    %v2207 = vunpack.c.h.b16 %v2025
    %v2208 = vunpack.c.l.b16 %v2026
    %v2209 = vunpack.c.h.b16 %v2026
    %v2210 = vunpack.c.l.b16 %v2027
    %v2211 = vunpack.c.h.b16 %v2027
    %v2212 = vunpack.c.l.b16 %v2028
    %v2213 = vunpack.c.h.b16 %v2028
    %v2214 = vunpack.c.l.b16 %v2029
    %v2215 = vunpack.c.h.b16 %v2029
    %v2216 = vunpack.c.l.b16 %v2030
    %v2217 = vunpack.c.h.b16 %v2030
    %v2218 = vpack.c.b16 %v2188, %v2186
    %v2219 = vpack.c.b16 %v2189, %v2187
    %v2220 = vpack.c.b16 %v2192, %v2190
    %v2221 = vpack.c.b16 %v2193, %v2191
    %v2222 = vpack.c.b16 %v2196, %v2194
    %v2223 = vpack.c.b16 %v2197, %v2195
    %v2224 = vpack.c.b16 %v2200, %v2198
    %v2225 = vpack.c.b16 %v2201, %v2199
    %v2226 = vpack.c.b16 %v2204, %v2202
    %v2227 = vpack.c.b16 %v2205, %v2203
    %v2228 = vpack.c.b16 %v2208, %v2206
    %v2229 = vpack.c.b16 %v2209, %v2207
    %v2230 = vpack.c.b16 %v2212, %v2210
    %v2231 = vpack.c.b16 %v2213, %v2211
    %v2232 = vpack.c.b16 %v2216, %v2214
    %v2233 = vpack.c.b16 %v2217, %v2215
    %2250 = vmatprep.subr.bf16.mxu0 %v2219
    %2251 = vmatpush1.bf16.msra.mxu0 %v2218
    %2252 = vmatprep.subr.bf16.mxu0 %v2221
    %2253 = vmatpush1.bf16.msra.mxu0 %v2220
    %2254 = vmatprep.subr.bf16.mxu0 %v2223
    %2255 = vmatpush1.bf16.msra.mxu0 %v2222
    %2256 = vmatprep.subr.bf16.mxu0 %v2225
    %2257 = vmatpush1.bf16.msra.mxu0 %v2224
    %2258 = vmatprep.subr.bf16.mxu0 %v2227
    %2259 = vmatpush1.bf16.msra.mxu0 %v2226
    %2260 = vmatprep.subr.bf16.mxu0 %v2229
    %2261 = vmatpush1.bf16.msra.mxu0 %v2228
    %2262 = vmatprep.subr.bf16.mxu0 %v2231
    %2263 = vmatpush1.bf16.msra.mxu0 %v2230
    %2264 = vmatprep.subr.bf16.mxu0 %v2233
    %2265 = vmatpush1.bf16.msra.mxu0 %v2232
    %2266 = vmatprep.subr.bf16.mxu0 0
    %2267 = vmatpush1.bf16.msra.mxu0 0
    %2268 = vmatprep.subr.bf16.mxu0 0
    %2269 = vmatpush1.bf16.msra.mxu0 0
    %2270 = vmatprep.subr.bf16.mxu0 0
    %2271 = vmatpush1.bf16.msra.mxu0 0
    %2272 = vmatprep.subr.bf16.mxu0 0
    %2273 = vmatpush1.bf16.msra.mxu0 0
    %2274 = vmatprep.subr.bf16.mxu0 0
    %2275 = vmatpush1.bf16.msra.mxu0 0
    %2276 = vmatprep.subr.bf16.mxu0 0
    %2277 = vmatpush1.bf16.msra.mxu0 0
    %2278 = vmatprep.subr.bf16.mxu0 0
    %2279 = vmatpush1.bf16.msra.mxu0 0
    %2280 = vmatprep.subr.bf16.mxu0 0
    %2281 = vmatpush1.bf16.msra.mxu0 0
    %2282 = vmatprep.mubr.bf16.mxu0 0
    %2283 = vmatmul.mubr.bf16.gmra.mrb[0].mxu0 %v490
    %v2284 = vpop.f32.mrb[0].mxu0
    %v2285 = vadd.f32 %v2162, %v2284
    %v2286 = vpop.f32.mrb[0].mxu0
    %v2287 = vadd.f32 %v2164, %v2286
    %v2288 = vpop.f32.mrb[0].mxu0
    %v2289 = vadd.f32 %v2166, %v2288
    %v2290 = vpop.f32.mrb[0].mxu0
    %v2291 = vadd.f32 %v2168, %v2290
    %2292 = vdwg.mxu0
    %v2293 = vld [vmem:[%s2014 + $0x100] sm:$0xff]
    %v2294 = vld [vmem:[%s2014 + $0x108] sm:$0xff]
    %v2295 = vld [vmem:[%s2014 + $0x110] sm:$0xff]
    %v2296 = vld [vmem:[%s2014 + $0x118] sm:$0xff]
    %v2297 = vld [vmem:[%s2014 + $0x120] sm:$0xff]
    %v2298 = vld [vmem:[%s2014 + $0x128] sm:$0xff]
    %v2299 = vld [vmem:[%s2014 + $0x130] sm:$0xff]
    %v2300 = vld [vmem:[%s2014 + $0x138] sm:$0xff]
    %v2301 = vld [vmem:[%s2014 + $0x140] sm:$0xff]
    %v2302 = vld [vmem:[%s2014 + $0x148] sm:$0xff]
    %v2303 = vld [vmem:[%s2014 + $0x150] sm:$0xff]
    %v2304 = vld [vmem:[%s2014 + $0x158] sm:$0xff]
    %v2305 = vld [vmem:[%s2014 + $0x160] sm:$0xff]
    %v2306 = vld [vmem:[%s2014 + $0x168] sm:$0xff]
    %v2307 = vld [vmem:[%s2014 + $0x170] sm:$0xff]
    %v2308 = vld [vmem:[%s2014 + $0x178] sm:$0xff]
    %v2325 = vunpack.c.l.b16 %v2293
    %v2326 = vunpack.c.h.b16 %v2293
    %v2327 = vunpack.c.l.b16 %v2294
    %v2328 = vunpack.c.h.b16 %v2294
    %v2329 = vunpack.c.l.b16 %v2295
    %v2330 = vunpack.c.h.b16 %v2295
    %v2331 = vunpack.c.l.b16 %v2296
    %v2332 = vunpack.c.h.b16 %v2296
    %v2333 = vunpack.c.l.b16 %v2297
    %v2334 = vunpack.c.h.b16 %v2297
    %v2335 = vunpack.c.l.b16 %v2298
    %v2336 = vunpack.c.h.b16 %v2298
    %v2337 = vunpack.c.l.b16 %v2299
    %v2338 = vunpack.c.h.b16 %v2299
    %v2339 = vunpack.c.l.b16 %v2300
    %v2340 = vunpack.c.h.b16 %v2300
    %v2341 = vunpack.c.l.b16 %v2301
    %v2342 = vunpack.c.h.b16 %v2301
    %v2343 = vunpack.c.l.b16 %v2302
    %v2344 = vunpack.c.h.b16 %v2302
    %v2345 = vunpack.c.l.b16 %v2303
    %v2346 = vunpack.c.h.b16 %v2303
    %v2347 = vunpack.c.l.b16 %v2304
    %v2348 = vunpack.c.h.b16 %v2304
    %v2349 = vunpack.c.l.b16 %v2305
    %v2350 = vunpack.c.h.b16 %v2305
    %v2351 = vunpack.c.l.b16 %v2306
    %v2352 = vunpack.c.h.b16 %v2306
    %v2353 = vunpack.c.l.b16 %v2307
    %v2354 = vunpack.c.h.b16 %v2307
    %v2355 = vunpack.c.l.b16 %v2308
    %v2356 = vunpack.c.h.b16 %v2308
    %v2357 = vpack.c.b16 %v2327, %v2325
    %v2358 = vpack.c.b16 %v2328, %v2326
    %v2359 = vpack.c.b16 %v2331, %v2329
    %v2360 = vpack.c.b16 %v2332, %v2330
    %v2361 = vpack.c.b16 %v2335, %v2333
    %v2362 = vpack.c.b16 %v2336, %v2334
    %v2363 = vpack.c.b16 %v2339, %v2337
    %v2364 = vpack.c.b16 %v2340, %v2338
    %v2365 = vpack.c.b16 %v2343, %v2341
    %v2366 = vpack.c.b16 %v2344, %v2342
    %v2367 = vpack.c.b16 %v2347, %v2345
    %v2368 = vpack.c.b16 %v2348, %v2346
    %v2369 = vpack.c.b16 %v2351, %v2349
    %v2370 = vpack.c.b16 %v2352, %v2350
    %v2371 = vpack.c.b16 %v2355, %v2353
    %v2372 = vpack.c.b16 %v2356, %v2354
    %2389 = vmatprep.subr.bf16.mxu0 %v2358
    %2390 = vmatpush1.bf16.msra.mxu0 %v2357
    %2391 = vmatprep.subr.bf16.mxu0 %v2360
    %2392 = vmatpush1.bf16.msra.mxu0 %v2359
    %2393 = vmatprep.subr.bf16.mxu0 %v2362
    %2394 = vmatpush1.bf16.msra.mxu0 %v2361
    %2395 = vmatprep.subr.bf16.mxu0 %v2364
    %2396 = vmatpush1.bf16.msra.mxu0 %v2363
    %2397 = vmatprep.subr.bf16.mxu0 %v2366
    %2398 = vmatpush1.bf16.msra.mxu0 %v2365
    %2399 = vmatprep.subr.bf16.mxu0 %v2368
    %2400 = vmatpush1.bf16.msra.mxu0 %v2367
    %2401 = vmatprep.subr.bf16.mxu0 %v2370
    %2402 = vmatpush1.bf16.msra.mxu0 %v2369
    %2403 = vmatprep.subr.bf16.mxu0 %v2372
    %2404 = vmatpush1.bf16.msra.mxu0 %v2371
    %2405 = vmatprep.subr.bf16.mxu0 0
    %2406 = vmatpush1.bf16.msra.mxu0 0
    %2407 = vmatprep.subr.bf16.mxu0 0
    %2408 = vmatpush1.bf16.msra.mxu0 0
    %2409 = vmatprep.subr.bf16.mxu0 0
    %2410 = vmatpush1.bf16.msra.mxu0 0
    %2411 = vmatprep.subr.bf16.mxu0 0
    %2412 = vmatpush1.bf16.msra.mxu0 0
    %2413 = vmatprep.subr.bf16.mxu0 0
    %2414 = vmatpush1.bf16.msra.mxu0 0
    %2415 = vmatprep.subr.bf16.mxu0 0
    %2416 = vmatpush1.bf16.msra.mxu0 0
    %2417 = vmatprep.subr.bf16.mxu0 0
    %2418 = vmatpush1.bf16.msra.mxu0 0
    %2419 = vmatprep.subr.bf16.mxu0 0
    %2420 = vmatpush1.bf16.msra.mxu0 0
    %2421 = vmatprep.mubr.bf16.mxu0 0
    %2422 = vmatmul.mubr.bf16.gmra.mrb[0].mxu0 %v970
    %v2423 = vpop.f32.mrb[0].mxu0
    %v2424 = vadd.f32 0.0, %v2423
    %v2425 = vpop.f32.mrb[0].mxu0
    %v2426 = vadd.f32 0.0, %v2425
    %v2427 = vpop.f32.mrb[0].mxu0
    %v2428 = vadd.f32 0.0, %v2427
    %v2429 = vpop.f32.mrb[0].mxu0
    %v2430 = vadd.f32 0.0, %v2429
    %2431 = vdwg.mxu0
    %v2432 = vadd.f32 %v2285, %v2424
    %v2433 = vadd.f32 %v2287, %v2426
    %v2434 = vadd.f32 %v2289, %v2428
    %v2435 = vadd.f32 %v2291, %v2430
    %s2436 = scalar_lea.vmem [#allocation10], 20
    %v2437 = vld [vmem:[%s2436] ss:$8 sm:$0x3]
    %s2438 = scalar_lea.vmem [#allocation10], 21
    %v2439 = vld [vmem:[%s2438] ss:$8 sm:$0x3]
    %v2440 = vadd.f32 %v2432, %v2434
    %v2441 = vrot.slane %v2440, 4
    %v2442 = vadd.f32 %v2440, %v2441
    %v2443 = vrot.slane %v2442, 2
    %v2444 = vadd.f32 %v2442, %v2443
    %v2445 = vrot.slane %v2444, 1
    %v2446 = vadd.f32 %v2444, %v2445
    %v2447 = vadd.f32 %v2433, %v2435
    %v2448 = vrot.slane %v2447, 4
    %v2449 = vadd.f32 %v2447, %v2448
    %v2450 = vrot.slane %v2449, 2
    %v2451 = vadd.f32 %v2449, %v2450
    %v2452 = vrot.slane %v2451, 1
    %v2453 = vadd.f32 %v2451, %v2452
    %v2454 = vmul.f32 %v2446, %v228
    %v2455 = vmul.f32 %v2453, %v228
    %v2456 = vsub.f32 %v2432, %v2454
    %v2457 = vsub.f32 %v2433, %v2455
    %v2458 = vsub.f32 %v2434, %v2454
    %v2459 = vsub.f32 %v2435, %v2455
    %v2460 = vmul.f32 %v2456, %v2456
    %v2461 = vmul.f32 %v2457, %v2457
    %v2462 = vmul.f32 %v2458, %v2458
    %v2463 = vmul.f32 %v2459, %v2459
    %v2464 = vadd.f32 %v2460, %v2462
    %v2465 = vrot.slane %v2464, 4
    %v2466 = vadd.f32 %v2464, %v2465
    %v2467 = vrot.slane %v2466, 2
    %v2468 = vadd.f32 %v2466, %v2467
    %v2469 = vrot.slane %v2468, 1
    %v2470 = vadd.f32 %v2468, %v2469
    %v2471 = vadd.f32 %v2461, %v2463
    %v2472 = vrot.slane %v2471, 4
    %v2473 = vadd.f32 %v2471, %v2472
    %v2474 = vrot.slane %v2473, 2
    %v2475 = vadd.f32 %v2473, %v2474
    %v2476 = vrot.slane %v2475, 1
    %v2477 = vadd.f32 %v2475, %v2476
    %v2478 = vmul.f32 %v2470, %v228
    %v2479 = vmul.f32 %v2477, %v228
    %v2480 = vadd.f32 %v2478, 1e-05
    %v2481 = vadd.f32 %v2479, 1e-05
    %v2482 = vrsqrt.pop %v2480
    %v2483 = vrsqrt.pop %v2481
    %v2486 = vcombine.low %v2482, %v2483
    %v2488 = vunpack.c.l.s4 1966171168
    %v2489 = vunpack.c.0.s8 %v2488
    %v2490 = vlaneseq
    %v2491 = vshrl.u32 %v2490, 7
    %v2492 = vsub.s32 %v2489, %v2491
    %v2493 = vrot.slane %v2486, %v2492
    %v2495 = vunpack.c.l.s4 1966171168
    %v2496 = vunpack.c.0.s8 %v2495
    %v2497 = vlaneseq
    %v2498 = vshrl.u32 %v2497, 7
    %v2499 = vsub.s32 %v2496, %v2498
    %v2500 = vrot.slane %v2493, %v2499
    %v2502 = vmul.f32 %v2437, %v2500
    %v2504 = vlaneseq
    %v2505 = vshrl.u32 %v2504, 7
    %v2506 = vsub.s32 0, %v2505
    %v2507 = vrot.slane %v2502, %v2506
    %v2508 = vlaneseq
    %v2509 = vshrl.u32 %v2508, 7
    %v2510 = vsub.s32 1, %v2509
    %v2511 = vrot.slane %v2502, %v2510
    %v2514 = vmul.f32 %v2456, %v2507
    %v2515 = vmul.f32 %v2457, %v2511
    %v2516 = vmul.f32 %v2458, %v2507
    %v2517 = vmul.f32 %v2459, %v2511
    %v2519 = vlaneseq
    %v2520 = vshrl.u32 %v2519, 7
    %v2521 = vsub.s32 0, %v2520
    %v2522 = vrot.slane %v2439, %v2521
    %v2523 = vlaneseq
    %v2524 = vshrl.u32 %v2523, 7
    %v2525 = vsub.s32 1, %v2524
    %v2526 = vrot.slane %v2439, %v2525
    %v2529 = vadd.f32 %v2514, %v2522
    %v2530 = vadd.f32 %v2515, %v2526
    %v2531 = vadd.f32 %v2516, %v2522
    %v2532 = vadd.f32 %v2517, %v2526
    %v2533 = vmax.f32 %v2529, %v2530
    %v2534 = vmax.f32 %v2531, %v2532
    %v2535 = vpack.c.bf16 %v2534, %v2533
    %v2536 = vld [vmem:[#allocation9] sm:$0xf]
    %v2537 = vld [vmem:[#allocation9 + $0x4] sm:$0xf]
    %v2538 = vld [vmem:[#allocation9 + $0x8] sm:$0xf]
    %v2539 = vld [vmem:[#allocation9 + $0xc] sm:$0xf]
    %v2540 = vld [vmem:[#allocation9 + $0x10] sm:$0xf]
    %v2541 = vld [vmem:[#allocation9 + $0x14] sm:$0xf]
    %v2542 = vld [vmem:[#allocation9 + $0x18] sm:$0xf]
    %v2543 = vld [vmem:[#allocation9 + $0x1c] sm:$0xf]
    %v2544 = vld [vmem:[#allocation9 + $0x20] sm:$0xf]
    %v2545 = vld [vmem:[#allocation9 + $0x24] sm:$0xf]
    %v2546 = vld [vmem:[#allocation9 + $0x28] sm:$0xf]
    %v2547 = vld [vmem:[#allocation9 + $0x2c] sm:$0xf]
    %v2548 = vld [vmem:[#allocation9 + $0x30] sm:$0xf]
    %v2549 = vld [vmem:[#allocation9 + $0x34] sm:$0xf]
    %v2550 = vld [vmem:[#allocation9 + $0x38] sm:$0xf]
    %v2551 = vld [vmem:[#allocation9 + $0x3c] sm:$0xf]
    %v2552 = vld [vmem:[#allocation9 + $0x40] sm:$0xf]
    %v2553 = vld [vmem:[#allocation9 + $0x44] sm:$0xf]
    %v2554 = vld [vmem:[#allocation9 + $0x48] sm:$0xf]
    %v2555 = vld [vmem:[#allocation9 + $0x4c] sm:$0xf]
    %v2556 = vld [vmem:[#allocation9 + $0x50] sm:$0xf]
    %v2557 = vld [vmem:[#allocation9 + $0x54] sm:$0xf]
    %v2558 = vld [vmem:[#allocation9 + $0x58] sm:$0xf]
    %v2559 = vld [vmem:[#allocation9 + $0x5c] sm:$0xf]
    %v2560 = vld [vmem:[#allocation9 + $0x60] sm:$0xf]
    %v2561 = vld [vmem:[#allocation9 + $0x64] sm:$0xf]
    %v2562 = vld [vmem:[#allocation9 + $0x68] sm:$0xf]
    %v2563 = vld [vmem:[#allocation9 + $0x6c] sm:$0xf]
    %v2564 = vld [vmem:[#allocation9 + $0x70] sm:$0xf]
    %v2565 = vld [vmem:[#allocation9 + $0x74] sm:$0xf]
    %v2566 = vld [vmem:[#allocation9 + $0x78] sm:$0xf]
    %v2567 = vld [vmem:[#allocation9 + $0x7c] sm:$0xf]
    %v2584 = vunpack.c.l.b16 %v2552
    %v2585 = vunpack.c.l.b16 %v2553
    %v2586 = vunpack.c.l.b16 %v2554
    %v2587 = vunpack.c.l.b16 %v2555
    %v2588 = vunpack.c.l.b16 %v2556
    %v2589 = vunpack.c.l.b16 %v2557
    %v2590 = vunpack.c.l.b16 %v2558
    %v2591 = vunpack.c.l.b16 %v2559
    %v2592 = vunpack.c.l.b16 %v2560
    %v2593 = vunpack.c.l.b16 %v2561
    %v2594 = vunpack.c.l.b16 %v2562
    %v2595 = vunpack.c.l.b16 %v2563
    %v2596 = vunpack.c.l.b16 %v2564
    %v2597 = vunpack.c.l.b16 %v2565
    %v2598 = vunpack.c.l.b16 %v2566
    %v2599 = vunpack.c.l.b16 %v2567
    %v2600 = vpack.c.b16 %v2585, %v2584
    %v2601 = vpack.c.b16 %v2587, %v2586
    %v2602 = vpack.c.b16 %v2589, %v2588
    %v2603 = vpack.c.b16 %v2591, %v2590
    %v2604 = vpack.c.b16 %v2593, %v2592
    %v2605 = vpack.c.b16 %v2595, %v2594
    %v2606 = vpack.c.b16 %v2597, %v2596
    %v2607 = vpack.c.b16 %v2599, %v2598
    %2616 = vmatprep.subr.bf16.mxu0 0
    %2617 = vmatpush1.bf16.msra.mxu0 %v2600
    %2618 = vmatprep.subr.bf16.mxu0 0
    %2619 = vmatpush1.bf16.msra.mxu0 %v2601
    %2620 = vmatprep.subr.bf16.mxu0 0
    %2621 = vmatpush1.bf16.msra.mxu0 %v2602
    %2622 = vmatprep.subr.bf16.mxu0 0
    %2623 = vmatpush1.bf16.msra.mxu0 %v2603
    %2624 = vmatprep.subr.bf16.mxu0 0
    %2625 = vmatpush1.bf16.msra.mxu0 %v2604
    %2626 = vmatprep.subr.bf16.mxu0 0
    %2627 = vmatpush1.bf16.msra.mxu0 %v2605
    %2628 = vmatprep.subr.bf16.mxu0 0
    %2629 = vmatpush1.bf16.msra.mxu0 %v2606
    %2630 = vmatprep.subr.bf16.mxu0 0
    %2631 = vmatpush1.bf16.msra.mxu0 %v2607
    %2632 = vmatprep.subr.bf16.mxu0 0
    %2633 = vmatpush1.bf16.msra.mxu0 0
    %2634 = vmatprep.subr.bf16.mxu0 0
    %2635 = vmatpush1.bf16.msra.mxu0 0
    %2636 = vmatprep.subr.bf16.mxu0 0
    %2637 = vmatpush1.bf16.msra.mxu0 0
    %2638 = vmatprep.subr.bf16.mxu0 0
    %2639 = vmatpush1.bf16.msra.mxu0 0
    %2640 = vmatprep.subr.bf16.mxu0 0
    %2641 = vmatpush1.bf16.msra.mxu0 0
    %2642 = vmatprep.subr.bf16.mxu0 0
    %2643 = vmatpush1.bf16.msra.mxu0 0
    %2644 = vmatprep.subr.bf16.mxu0 0
    %2645 = vmatpush1.bf16.msra.mxu0 0
    %2646 = vmatprep.subr.bf16.mxu0 0
    %2647 = vmatpush1.bf16.msra.mxu0 0
    %2648 = vmatprep.mubr.bf16.mxu0 0
    %2649 = vmatmul.mubr.bf16.gmra.mrb[0].mxu0 %v2013
    %v2650 = vpop.f32.mrb[0].mxu0
    %v2651 = vadd.f32 0.0, %v2650
    %v2652 = vpop.f32.mrb[0].mxu0
    %v2653 = vpop.f32.mrb[0].mxu0
    %v2654 = vadd.f32 0.0, %v2653
    %v2655 = vpop.f32.mrb[0].mxu0
    %2656 = vdwg.mxu0
    %v2673 = vunpack.c.l.b16 %v2536
    %v2674 = vunpack.c.l.b16 %v2537
    %v2675 = vunpack.c.l.b16 %v2538
    %v2676 = vunpack.c.l.b16 %v2539
    %v2677 = vunpack.c.l.b16 %v2540
    %v2678 = vunpack.c.l.b16 %v2541
    %v2679 = vunpack.c.l.b16 %v2542
    %v2680 = vunpack.c.l.b16 %v2543
    %v2681 = vunpack.c.l.b16 %v2544
    %v2682 = vunpack.c.l.b16 %v2545
    %v2683 = vunpack.c.l.b16 %v2546
    %v2684 = vunpack.c.l.b16 %v2547
    %v2685 = vunpack.c.l.b16 %v2548
    %v2686 = vunpack.c.l.b16 %v2549
    %v2687 = vunpack.c.l.b16 %v2550
    %v2688 = vunpack.c.l.b16 %v2551
    %v2689 = vpack.c.b16 %v2674, %v2673
    %v2690 = vpack.c.b16 %v2676, %v2675
    %v2691 = vpack.c.b16 %v2678, %v2677
    %v2692 = vpack.c.b16 %v2680, %v2679
    %v2693 = vpack.c.b16 %v2682, %v2681
    %v2694 = vpack.c.b16 %v2684, %v2683
    %v2695 = vpack.c.b16 %v2686, %v2685
    %v2696 = vpack.c.b16 %v2688, %v2687
    %2705 = vmatprep.subr.bf16.mxu0 0
    %2706 = vmatpush1.bf16.msra.mxu0 %v2689
    %2707 = vmatprep.subr.bf16.mxu0 0
    %2708 = vmatpush1.bf16.msra.mxu0 %v2690
    %2709 = vmatprep.subr.bf16.mxu0 0
    %2710 = vmatpush1.bf16.msra.mxu0 %v2691
    %2711 = vmatprep.subr.bf16.mxu0 0
    %2712 = vmatpush1.bf16.msra.mxu0 %v2692
    %2713 = vmatprep.subr.bf16.mxu0 0
    %2714 = vmatpush1.bf16.msra.mxu0 %v2693
    %2715 = vmatprep.subr.bf16.mxu0 0
    %2716 = vmatpush1.bf16.msra.mxu0 %v2694
    %2717 = vmatprep.subr.bf16.mxu0 0
    %2718 = vmatpush1.bf16.msra.mxu0 %v2695
    %2719 = vmatprep.subr.bf16.mxu0 0
    %2720 = vmatpush1.bf16.msra.mxu0 %v2696
    %2721 = vmatprep.subr.bf16.mxu0 0
    %2722 = vmatpush1.bf16.msra.mxu0 0
    %2723 = vmatprep.subr.bf16.mxu0 0
    %2724 = vmatpush1.bf16.msra.mxu0 0
    %2725 = vmatprep.subr.bf16.mxu0 0
    %2726 = vmatpush1.bf16.msra.mxu0 0
    %2727 = vmatprep.subr.bf16.mxu0 0
    %2728 = vmatpush1.bf16.msra.mxu0 0
    %2729 = vmatprep.subr.bf16.mxu0 0
    %2730 = vmatpush1.bf16.msra.mxu0 0
    %2731 = vmatprep.subr.bf16.mxu0 0
    %2732 = vmatpush1.bf16.msra.mxu0 0
    %2733 = vmatprep.subr.bf16.mxu0 0
    %2734 = vmatpush1.bf16.msra.mxu0 0
    %2735 = vmatprep.subr.bf16.mxu0 0
    %2736 = vmatpush1.bf16.msra.mxu0 0
    %2737 = vmatprep.mubr.bf16.mxu0 0
    %2738 = vmatmul.mubr.bf16.gmra.mrb[0].mxu0 %v1491
    %v2739 = vpop.f32.mrb[0].mxu0
    %v2740 = vadd.f32 %v2651, %v2739
    %v2741 = vpop.f32.mrb[0].mxu0
    %v2742 = vpop.f32.mrb[0].mxu0
    %v2743 = vadd.f32 %v2654, %v2742
    %v2744 = vpop.f32.mrb[0].mxu0
    %2745 = vdwg.mxu0
    %v2746 = vld [vmem:[#allocation9 + $0x80] sm:$0xf]
    %v2747 = vld [vmem:[#allocation9 + $0x84] sm:$0xf]
    %v2748 = vld [vmem:[#allocation9 + $0x88] sm:$0xf]
    %v2749 = vld [vmem:[#allocation9 + $0x8c] sm:$0xf]
    %v2750 = vld [vmem:[#allocation9 + $0x90] sm:$0xf]
    %v2751 = vld [vmem:[#allocation9 + $0x94] sm:$0xf]
    %v2752 = vld [vmem:[#allocation9 + $0x98] sm:$0xf]
    %v2753 = vld [vmem:[#allocation9 + $0x9c] sm:$0xf]
    %v2754 = vld [vmem:[#allocation9 + $0xa0] sm:$0xf]
    %v2755 = vld [vmem:[#allocation9 + $0xa4] sm:$0xf]
    %v2756 = vld [vmem:[#allocation9 + $0xa8] sm:$0xf]
    %v2757 = vld [vmem:[#allocation9 + $0xac] sm:$0xf]
    %v2758 = vld [vmem:[#allocation9 + $0xb0] sm:$0xf]
    %v2759 = vld [vmem:[#allocation9 + $0xb4] sm:$0xf]
    %v2760 = vld [vmem:[#allocation9 + $0xb8] sm:$0xf]
    %v2761 = vld [vmem:[#allocation9 + $0xbc] sm:$0xf]
    %v2778 = vunpack.c.l.b16 %v2746
    %v2779 = vunpack.c.l.b16 %v2747
    %v2780 = vunpack.c.l.b16 %v2748
    %v2781 = vunpack.c.l.b16 %v2749
    %v2782 = vunpack.c.l.b16 %v2750
    %v2783 = vunpack.c.l.b16 %v2751
    %v2784 = vunpack.c.l.b16 %v2752
    %v2785 = vunpack.c.l.b16 %v2753
    %v2786 = vunpack.c.l.b16 %v2754
    %v2787 = vunpack.c.l.b16 %v2755
    %v2788 = vunpack.c.l.b16 %v2756
    %v2789 = vunpack.c.l.b16 %v2757
    %v2790 = vunpack.c.l.b16 %v2758
    %v2791 = vunpack.c.l.b16 %v2759
    %v2792 = vunpack.c.l.b16 %v2760
    %v2793 = vunpack.c.l.b16 %v2761
    %v2794 = vpack.c.b16 %v2779, %v2778
    %v2795 = vpack.c.b16 %v2781, %v2780
    %v2796 = vpack.c.b16 %v2783, %v2782
    %v2797 = vpack.c.b16 %v2785, %v2784
    %v2798 = vpack.c.b16 %v2787, %v2786
    %v2799 = vpack.c.b16 %v2789, %v2788
    %v2800 = vpack.c.b16 %v2791, %v2790
    %v2801 = vpack.c.b16 %v2793, %v2792
    %2810 = vmatprep.subr.bf16.mxu0 0
    %2811 = vmatpush1.bf16.msra.mxu0 %v2794
    %2812 = vmatprep.subr.bf16.mxu0 0
    %2813 = vmatpush1.bf16.msra.mxu0 %v2795
    %2814 = vmatprep.subr.bf16.mxu0 0
    %2815 = vmatpush1.bf16.msra.mxu0 %v2796
    %2816 = vmatprep.subr.bf16.mxu0 0
    %2817 = vmatpush1.bf16.msra.mxu0 %v2797
    %2818 = vmatprep.subr.bf16.mxu0 0
    %2819 = vmatpush1.bf16.msra.mxu0 %v2798
    %2820 = vmatprep.subr.bf16.mxu0 0
    %2821 = vmatpush1.bf16.msra.mxu0 %v2799
    %2822 = vmatprep.subr.bf16.mxu0 0
    %2823 = vmatpush1.bf16.msra.mxu0 %v2800
    %2824 = vmatprep.subr.bf16.mxu0 0
    %2825 = vmatpush1.bf16.msra.mxu0 %v2801
    %2826 = vmatprep.subr.bf16.mxu0 0
    %2827 = vmatpush1.bf16.msra.mxu0 0
    %2828 = vmatprep.subr.bf16.mxu0 0
    %2829 = vmatpush1.bf16.msra.mxu0 0
    %2830 = vmatprep.subr.bf16.mxu0 0
    %2831 = vmatpush1.bf16.msra.mxu0 0
    %2832 = vmatprep.subr.bf16.mxu0 0
    %2833 = vmatpush1.bf16.msra.mxu0 0
    %2834 = vmatprep.subr.bf16.mxu0 0
    %2835 = vmatpush1.bf16.msra.mxu0 0
    %2836 = vmatprep.subr.bf16.mxu0 0
    %2837 = vmatpush1.bf16.msra.mxu0 0
    %2838 = vmatprep.subr.bf16.mxu0 0
    %2839 = vmatpush1.bf16.msra.mxu0 0
    %2840 = vmatprep.subr.bf16.mxu0 0
    %2841 = vmatpush1.bf16.msra.mxu0 0
    %2842 = vmatprep.mubr.bf16.mxu0 0
    %2843 = vmatmul.mubr.bf16.gmra.mrb[0].mxu0 %v2535
    %v2844 = vpop.f32.mrb[0].mxu0
    %v2845 = vadd.f32 0.0, %v2844
    %v2846 = vpop.f32.mrb[0].mxu0
    %v2847 = vpop.f32.mrb[0].mxu0
    %v2848 = vadd.f32 0.0, %v2847
    %v2849 = vpop.f32.mrb[0].mxu0
    %2850 = vdwg.mxu0
    %v2851 = vadd.f32 %v2740, %v2845
    %v2852 = vadd.f32 %v2743, %v2848
    %v2853 = vld [vmem:[#allocation10 + $0x16] ss:$0 sm:$0xff]
    %v2854 = vadd.f32 %v2851, %v2853
    %v2855 = vadd.f32 %v2852, %v2853
    %v2856 = vand.u32 2147483647, %v2854
    %v2857 = vand.u32 2147483647, %v2855
    %v2858 = vsub.f32 0.0, %v2856
    %v2859 = vsub.f32 0.0, %v2857
    %v2860 = vmul.f32 %v2858, 1.442695
    %v2861 = vpow.pop %v2860
    %v2862 = vmul.f32 %v2859, 1.442695
    %v2863 = vpow.pop %v2862
    %vm2864 = vcmp.ge.f32.partialorder %v2854, 0.0
    %vm2865 = vcmp.ge.f32.partialorder %v2855, 0.0
    %v2866 = vadd.f32 %v2861, 1.0
    %v2867 = vadd.f32 %v2863, 1.0
    %v2868 = vrcp.pop %v2866
    %v2869 = vmul.f32 1.0, %v2868
    %v2870 = vrcp.pop %v2867
    %v2871 = vmul.f32 1.0, %v2870
    %v2872 = vmul.f32 %v2861, %v2868
    %v2873 = vmul.f32 %v2863, %v2870
    %v2874 = vsel %vm2864, %v2869, %v2872
    %v2875 = vsel %vm2865, %v2871, %v2873
    %vm2876 = vcmask 64512
    %2877 = vst.msk [vmem:[%s6] sm:$0xff] %vm2876, %v2874
    %2878 = vst.msk [vmem:[%s6 + $0x8] sm:$0xff] %vm2876, %v2875
    // Predicated region
    $region50: #{tpu_custom_call.1} parent=1 // pred_check
      _
    $region51: #{tpu_custom_call.1} parent=1 // pred_check_branch
      %2880 = sbr.rel (0) target = $region53
    $region52: #{tpu_custom_call.1} parent=1 // pred_region
      _
    $region53: #{tpu_custom_call.1} parent=1 // pred_fallthru
      _
    // Predicated region
    $region54: #{tpu_custom_call.1} parent=1 // pred_check
      _
    $region55: #{tpu_custom_call.1} parent=1 // pred_check_branch
      %2882 = sbr.rel (0) target = $region57
    $region56: #{tpu_custom_call.1} parent=1 // pred_region
      _
    $region57: #{tpu_custom_call.1} parent=1 // pred_fallthru
      _
    %2883 = vsyncpa [#allocation3], 1
    %2884 = vsyncpa [#allocation5], 1
    %2885 = vsyncpa [#allocation8], 1
    %2886 = vsyncpa [#allocation11], 1

</llo_original>
